<compile_context>
chip_gen: v6e
topology: v6e:2x2x1
jax: 0.10.0
libtpu: 0.0.40
codegen_flags: <defaults>
</compile_context>

<pallas_src>
import functools

import jax
import jax.numpy as jnp
from jax.experimental import pallas as pl
from jax.experimental.pallas import tpu as pltpu

_LANE = 128
_SUB_BF16 = 16  # bf16 sublane packing granularity for batch tiles


def _round_up(x, m):
    return ((x + m - 1) // m) * m


def _mlp_disc_kernel(*refs, num_layers, negative_slope):
    """refs = (x_ref, w0, b0, w1, b1, ..., w_{L-1}, b_{L-1}, out_ref)."""
    x_ref = refs[0]
    out_ref = refs[-1]
    params = refs[1:-1]

    h = x_ref[...]                                    # (TB, K) bf16 activations
    for layer in range(num_layers):
        w = params[2 * layer][...]                    # (in, out_p) bf16, VMEM-resident
        b = params[2 * layer + 1][...]                # (1, out_p)  f32,  VMEM-resident
        # bf16 MXU matmul, f32 accumulation.
        y = jnp.dot(h, w, preferred_element_type=jnp.float32) + b
        if layer < num_layers - 1:
            # LeakyReLU(0.2) on the VPU in f32, recast to bf16 for the next MXU pass.
            h = jnp.where(y >= 0.0, y, negative_slope * y).astype(jnp.bfloat16)
        else:
            # Exact sigmoid: exp on the EUP, exact divide -- both free here.
            h = 1.0 / (1.0 + jnp.exp(-y))
    out_ref[...] = h.astype(out_ref.dtype)            # lane-dense (TB, out_p) store


def mlp_discriminator_forward(z, weights, biases, *, negative_slope=0.2):
    """Fused forward of MLPDiscriminator.

    z:       (B, ...) input; flattened to (B, K) like torch's z.view(B, -1).
    weights: list of torch-layout weights, weights[l].shape == (out_l, in_l).
    biases:  list of biases, biases[l].shape == (out_l,).
    Returns: (B, out_last) float32 sigmoid probabilities.
    """
    num_layers = len(weights)
    B = z.shape[0]
    x = jnp.asarray(z).reshape(B, -1)
    K = x.shape[1]

    # Feature dims: input stays at full K (block == full array dim, no lane padding);
    # hidden / output dims padded to 128 lanes for lane-dense stores.
    dims = [K] + [_round_up(int(w.shape[0]), _LANE) for w in weights]
    out_true = int(weights[-1].shape[0])

    # Batch tiling: 16-row granularity (bf16), tiles up to 512 rows, >=2 grid steps
    # when the batch allows (v7x megacore), minimal over-padding via balanced tiles.
    b16 = _round_up(max(B, 1), _SUB_BF16)
    steps = max(pl.cdiv(b16, 512), 2 if b16 >= 2 * _SUB_BF16 else 1)
    tb = _round_up(pl.cdiv(b16, steps), _SUB_BF16)
    b_pad = steps * tb

    # bf16 input stream (halves the dominant HBM traffic); padded rows are zero.
    x_p = (jnp.zeros((b_pad, K), jnp.bfloat16)
           .at[:B, :].set(x.astype(jnp.bfloat16)))

    packed = []
    for l in range(num_layers):
        w = jnp.asarray(weights[l], jnp.float32).T            # (in_l, out_l); y = x @ W.T + b
        b = jnp.asarray(biases[l], jnp.float32).reshape(1, -1)
        in_d = K if l == 0 else dims[l]
        w_p = (jnp.zeros((in_d, dims[l + 1]), jnp.float32)
               .at[:w.shape[0], :w.shape[1]].set(w)
               .astype(jnp.bfloat16))                          # bf16 weights on the MXU
        b_p = jnp.zeros((1, dims[l + 1]), jnp.float32).at[:, :b.shape[1]].set(b)
        packed += [w_p, b_p]

    kernel = functools.partial(_mlp_disc_kernel,
                               num_layers=num_layers,
                               negative_slope=negative_slope)

    def run(weight_pipeline_mode):
        extra = ({} if weight_pipeline_mode is None
                 else {"pipeline_mode": weight_pipeline_mode})
        in_specs = [pl.BlockSpec((tb, K), lambda i: (i, 0))]   # batch tile streams
        for l in range(num_layers):
            in_d = K if l == 0 else dims[l]
            # Constant index_map -> weights/biases resident in VMEM across the grid.
            in_specs.append(pl.BlockSpec((in_d, dims[l + 1]), lambda i: (0, 0), **extra))
            in_specs.append(pl.BlockSpec((1, dims[l + 1]), lambda i: (0, 0), **extra))
        out_specs = pl.BlockSpec((tb, dims[-1]), lambda i: (i, 0))  # lane-dense bf16 slab
        return pl.pallas_call(
            kernel,
            out_shape=jax.ShapeDtypeStruct((b_pad, dims[-1]), jnp.bfloat16),
            grid=(b_pad // tb,),
            in_specs=in_specs,
            out_specs=out_specs,
            compiler_params=pltpu.CompilerParams(
                dimension_semantics=("parallel",)),
        )(x_p, *packed)

    try:
        # Single VMEM buffer for the never-changing resident weights/biases.
        out_padded = run(pl.Buffered(1))
    except Exception:
        # Fallback: default double-buffering if single-buffering is unsupported.
        out_padded = run(None)

    # Slice away batch / lane padding; return f32 probabilities.
    return out_padded[:B, :out_true].astype(jnp.float32)


if __name__ == "__main__":
    # TODO(synk): Model.save/restore (torch checkpoint file I/O) has no Pallas equivalent
    # and is not part of forward(); only the forward pass is implemented here.
    key = jax.random.PRNGKey(0)
    arch = [784, 256, 64, 1]          # flattened 1x28x28 input -> ... -> single probability
    B = 4
    keys = jax.random.split(key, 1 + 2 * (len(arch) - 1))
    z = jax.random.normal(keys[0], (B, 1, 28, 28), jnp.float32)

    weights, biases = [], []
    for l in range(len(arch) - 1):
        w = jax.random.normal(keys[1 + 2 * l], (arch[l + 1], arch[l]),
                              jnp.float32) / jnp.sqrt(arch[l])
        b = 0.1 * jax.random.normal(keys[2 + 2 * l], (arch[l + 1],), jnp.float32)
        weights.append(w)
        biases.append(b)

    out = mlp_discriminator_forward(z, weights, biases)
    out = jax.block_until_ready(out)

    # Pure-JAX reference with matching bf16-matmul / f32-accumulate precision.
    h = z.reshape(B, -1).astype(jnp.bfloat16)
    for l in range(len(arch) - 1):
        y = jnp.dot(h, weights[l].T.astype(jnp.bfloat16),
                    preferred_element_type=jnp.float32) + biases[l]
        if l < len(arch) - 2:
            h = jnp.where(y >= 0.0, y, 0.2 * y).astype(jnp.bfloat16)
        else:
            h = jax.nn.sigmoid(y)

    assert out.shape == (B, 1), out.shape
    assert jnp.allclose(out, h, atol=2e-2), (out, h)
    print("KERNEL_OK")
</pallas_src>

<mosaic_0001>
module attributes {stable_mosaic.version = 11 : i64} {
  func.func @_mlp_disc_kernel(%arg0: i32, %arg1: memref<16x784xbf16, #tpu.memory_space<vmem>>, %arg2: memref<784x256xbf16, #tpu.memory_space<vmem>>, %arg3: memref<1x256xf32, #tpu.memory_space<vmem>>, %arg4: memref<256x128xbf16, #tpu.memory_space<vmem>>, %arg5: memref<1x128xf32, #tpu.memory_space<vmem>>, %arg6: memref<128x128xbf16, #tpu.memory_space<vmem>>, %arg7: memref<1x128xf32, #tpu.memory_space<vmem>>, %arg8: memref<16x128xbf16, #tpu.memory_space<vmem>>) attributes {dimension_semantics = [#tpu.dimension_semantics<parallel>], iteration_bounds = array<i64: 1>, scalar_prefetch = 0 : i64, scratch_operands = 0 : i64, tpu.core_type = #tpu.core_type<tc>, window_params = [{transform_indices = @transform_0, window_bounds = array<i64: 16, 784>}, {pipeline_mode = #tpu.pipeline_mode<synchronous>, transform_indices = @transform_1, window_bounds = array<i64: 784, 256>}, {pipeline_mode = #tpu.pipeline_mode<synchronous>, transform_indices = @transform_2, window_bounds = array<i64: 1, 256>}, {pipeline_mode = #tpu.pipeline_mode<synchronous>, transform_indices = @transform_3, window_bounds = array<i64: 256, 128>}, {pipeline_mode = #tpu.pipeline_mode<synchronous>, transform_indices = @transform_4, window_bounds = array<i64: 1, 128>}, {pipeline_mode = #tpu.pipeline_mode<synchronous>, transform_indices = @transform_5, window_bounds = array<i64: 128, 128>}, {pipeline_mode = #tpu.pipeline_mode<synchronous>, transform_indices = @transform_6, window_bounds = array<i64: 1, 128>}, {transform_indices = @transform_7, window_bounds = array<i64: 16, 128>}]} {
    %c0 = arith.constant 0 : index
    %c0_0 = arith.constant 0 : index
    %0 = vector.load %arg1[%c0, %c0_0] : memref<16x784xbf16, #tpu.memory_space<vmem>>, vector<16x784xbf16>
    %c0_1 = arith.constant 0 : index
    %c0_2 = arith.constant 0 : index
    %1 = vector.load %arg2[%c0_1, %c0_2] : memref<784x256xbf16, #tpu.memory_space<vmem>>, vector<784x256xbf16>
    %c0_3 = arith.constant 0 : index
    %c0_4 = arith.constant 0 : index
    %2 = vector.load %arg3[%c0_3, %c0_4] : memref<1x256xf32, #tpu.memory_space<vmem>>, vector<1x256xf32>
    %cst = arith.constant dense<0.000000e+00> : vector<16x256xf32>
    %3 = tpu.matmul %0, %1, %cst {dimension_numbers = #tpu.dot_dimension_numbers<[1], [0], [0], [1], [0, 0, 1, 1], [], []>} : vector<16x784xbf16>, vector<784x256xbf16>, vector<16x256xf32> -> vector<16x256xf32>
    %4 = vector.broadcast %2 : vector<1x256xf32> to vector<16x256xf32>
    %5 = arith.addf %3, %4 : vector<16x256xf32>
    %cst_5 = arith.constant 0.000000e+00 : f32
    %6 = vector.broadcast %cst_5 : f32 to vector<16x256xf32>
    %7 = arith.cmpf oge, %5, %6 : vector<16x256xf32>
    %cst_6 = arith.constant 2.000000e-01 : f32
    %8 = vector.broadcast %cst_6 : f32 to vector<16x256xf32>
    %9 = arith.mulf %8, %5 : vector<16x256xf32>
    %10 = arith.select %7, %5, %9 : vector<16x256xi1>, vector<16x256xf32>
    %11 = arith.truncf %10 : vector<16x256xf32> to vector<16x256xbf16>
    %c0_7 = arith.constant 0 : index
    %c0_8 = arith.constant 0 : index
    %12 = vector.load %arg4[%c0_7, %c0_8] : memref<256x128xbf16, #tpu.memory_space<vmem>>, vector<256x128xbf16>
    %c0_9 = arith.constant 0 : index
    %c0_10 = arith.constant 0 : index
    %13 = vector.load %arg5[%c0_9, %c0_10] : memref<1x128xf32, #tpu.memory_space<vmem>>, vector<1x128xf32>
    %cst_11 = arith.constant dense<0.000000e+00> : vector<16x128xf32>
    %14 = tpu.matmul %11, %12, %cst_11 {dimension_numbers = #tpu.dot_dimension_numbers<[1], [0], [0], [1], [0, 0, 1, 1], [], []>} : vector<16x256xbf16>, vector<256x128xbf16>, vector<16x128xf32> -> vector<16x128xf32>
    %15 = vector.broadcast %13 : vector<1x128xf32> to vector<16x128xf32>
    %16 = arith.addf %14, %15 : vector<16x128xf32>
    %cst_12 = arith.constant 0.000000e+00 : f32
    %17 = vector.broadcast %cst_12 : f32 to vector<16x128xf32>
    %18 = arith.cmpf oge, %16, %17 : vector<16x128xf32>
    %cst_13 = arith.constant 2.000000e-01 : f32
    %19 = vector.broadcast %cst_13 : f32 to vector<16x128xf32>
    %20 = arith.mulf %19, %16 : vector<16x128xf32>
    %21 = arith.select %18, %16, %20 : vector<16x128xi1>, vector<16x128xf32>
    %22 = arith.truncf %21 : vector<16x128xf32> to vector<16x128xbf16>
    %c0_14 = arith.constant 0 : index
    %c0_15 = arith.constant 0 : index
    %23 = vector.load %arg6[%c0_14, %c0_15] : memref<128x128xbf16, #tpu.memory_space<vmem>>, vector<128x128xbf16>
    %c0_16 = arith.constant 0 : index
    %c0_17 = arith.constant 0 : index
    %24 = vector.load %arg7[%c0_16, %c0_17] : memref<1x128xf32, #tpu.memory_space<vmem>>, vector<1x128xf32>
    %cst_18 = arith.constant dense<0.000000e+00> : vector<16x128xf32>
    %25 = tpu.matmul %22, %23, %cst_18 {dimension_numbers = #tpu.dot_dimension_numbers<[1], [0], [0], [1], [0, 0, 1, 1], [], []>} : vector<16x128xbf16>, vector<128x128xbf16>, vector<16x128xf32> -> vector<16x128xf32>
    %26 = vector.broadcast %24 : vector<1x128xf32> to vector<16x128xf32>
    %27 = arith.addf %25, %26 : vector<16x128xf32>
    %cst_19 = arith.constant 0.000000e+00 : f32
    %28 = vector.broadcast %cst_19 : f32 to vector<16x128xf32>
    %29 = arith.subf %28, %27 : vector<16x128xf32>
    %30 = math.exp %29 : vector<16x128xf32>
    %cst_20 = arith.constant 1.000000e+00 : f32
    %31 = vector.broadcast %cst_20 : f32 to vector<16x128xf32>
    %32 = arith.addf %31, %30 : vector<16x128xf32>
    %cst_21 = arith.constant 1.000000e+00 : f32
    %33 = vector.broadcast %cst_21 : f32 to vector<16x128xf32>
    %34 = arith.divf %33, %32 : vector<16x128xf32>
    %35 = arith.truncf %34 : vector<16x128xf32> to vector<16x128xbf16>
    %c0_22 = arith.constant 0 : index
    %c0_23 = arith.constant 0 : index
    %36 = vector.load %arg8[%c0_22, %c0_23] : memref<16x128xbf16, #tpu.memory_space<vmem>>, vector<16x128xbf16>
    tpu.vector_store %arg8[%c0_22, %c0_23], %35 {strides = array<i32>} : memref<16x128xbf16, #tpu.memory_space<vmem>>, vector<16x128xbf16>,
    return
  }
  func.func @transform_0(%arg0: i32) -> (i32, i32) {
    %c0_i32 = arith.constant 0 : i32
    %c0_i32_0 = arith.constant 0 : i32
    return %arg0, %c0_i32 : i32, i32
  }
  func.func @transform_1(%arg0: i32) -> (i32, i32) {
    %c0_i32 = arith.constant 0 : i32
    %c0_i32_0 = arith.constant 0 : i32
    %c0_i32_1 = arith.constant 0 : i32
    return %c0_i32, %c0_i32_0 : i32, i32
  }
  func.func @transform_2(%arg0: i32) -> (i32, i32) {
    %c0_i32 = arith.constant 0 : i32
    %c0_i32_0 = arith.constant 0 : i32
    %c0_i32_1 = arith.constant 0 : i32
    return %c0_i32, %c0_i32_0 : i32, i32
  }
  func.func @transform_3(%arg0: i32) -> (i32, i32) {
    %c0_i32 = arith.constant 0 : i32
    %c0_i32_0 = arith.constant 0 : i32
    %c0_i32_1 = arith.constant 0 : i32
    return %c0_i32, %c0_i32_0 : i32, i32
  }
  func.func @transform_4(%arg0: i32) -> (i32, i32) {
    %c0_i32 = arith.constant 0 : i32
    %c0_i32_0 = arith.constant 0 : i32
    %c0_i32_1 = arith.constant 0 : i32
    return %c0_i32, %c0_i32_0 : i32, i32
  }
  func.func @transform_5(%arg0: i32) -> (i32, i32) {
    %c0_i32 = arith.constant 0 : i32
    %c0_i32_0 = arith.constant 0 : i32
    %c0_i32_1 = arith.constant 0 : i32
    return %c0_i32, %c0_i32_0 : i32, i32
  }
  func.func @transform_6(%arg0: i32) -> (i32, i32) {
    %c0_i32 = arith.constant 0 : i32
    %c0_i32_0 = arith.constant 0 : i32
    %c0_i32_1 = arith.constant 0 : i32
    return %c0_i32, %c0_i32_0 : i32, i32
  }
  func.func @transform_7(%arg0: i32) -> (i32, i32) {
    %c0_i32 = arith.constant 0 : i32
    %c0_i32_0 = arith.constant 0 : i32
    return %arg0, %c0_i32 : i32, i32
  }
}

module attributes {stable_mosaic.version = 11 : i64} {
  func.func @_mlp_disc_kernel(%arg0: i32, %arg1: memref<16x784xbf16, #tpu.memory_space<vmem>>, %arg2: memref<784x256xbf16, #tpu.memory_space<vmem>>, %arg3: memref<1x256xf32, #tpu.memory_space<vmem>>, %arg4: memref<256x128xbf16, #tpu.memory_space<vmem>>, %arg5: memref<1x128xf32, #tpu.memory_space<vmem>>, %arg6: memref<128x128xbf16, #tpu.memory_space<vmem>>, %arg7: memref<1x128xf32, #tpu.memory_space<vmem>>, %arg8: memref<16x128xbf16, #tpu.memory_space<vmem>>) attributes {dimension_semantics = [#tpu.dimension_semantics<parallel>], iteration_bounds = array<i64: 1>, scalar_prefetch = 0 : i64, scratch_operands = 0 : i64, tpu.core_type = #tpu.core_type<tc>, window_params = [{transform_indices = @transform_0, window_bounds = array<i64: 16, 784>}, {pipeline_mode = #tpu.pipeline_mode<synchronous>, transform_indices = @transform_1, window_bounds = array<i64: 784, 256>}, {pipeline_mode = #tpu.pipeline_mode<synchronous>, transform_indices = @transform_2, window_bounds = array<i64: 1, 256>}, {pipeline_mode = #tpu.pipeline_mode<synchronous>, transform_indices = @transform_3, window_bounds = array<i64: 256, 128>}, {pipeline_mode = #tpu.pipeline_mode<synchronous>, transform_indices = @transform_4, window_bounds = array<i64: 1, 128>}, {pipeline_mode = #tpu.pipeline_mode<synchronous>, transform_indices = @transform_5, window_bounds = array<i64: 128, 128>}, {pipeline_mode = #tpu.pipeline_mode<synchronous>, transform_indices = @transform_6, window_bounds = array<i64: 1, 128>}, {transform_indices = @transform_7, window_bounds = array<i64: 16, 128>}]} {
    %c0 = arith.constant 0 : index
    %c0_0 = arith.constant 0 : index
    %0 = vector.load %arg1[%c0, %c0_0] : memref<16x784xbf16, #tpu.memory_space<vmem>>, vector<16x784xbf16>
    %c0_1 = arith.constant 0 : index
    %c0_2 = arith.constant 0 : index
    %1 = vector.load %arg2[%c0_1, %c0_2] : memref<784x256xbf16, #tpu.memory_space<vmem>>, vector<784x256xbf16>
    %c0_3 = arith.constant 0 : index
    %c0_4 = arith.constant 0 : index
    %2 = vector.load %arg3[%c0_3, %c0_4] : memref<1x256xf32, #tpu.memory_space<vmem>>, vector<1x256xf32>
    %cst = arith.constant dense<0.000000e+00> : vector<16x256xf32>
    %3 = tpu.matmul %0, %1, %cst {dimension_numbers = #tpu.dot_dimension_numbers<[1], [0], [0], [1], [0, 0, 1, 1], [], []>} : vector<16x784xbf16>, vector<784x256xbf16>, vector<16x256xf32> -> vector<16x256xf32>
    %4 = vector.broadcast %2 : vector<1x256xf32> to vector<16x256xf32>
    %5 = arith.addf %3, %4 : vector<16x256xf32>
    %cst_5 = arith.constant 0.000000e+00 : f32
    %6 = vector.broadcast %cst_5 : f32 to vector<16x256xf32>
    %7 = arith.cmpf oge, %5, %6 : vector<16x256xf32>
    %cst_6 = arith.constant 2.000000e-01 : f32
    %8 = vector.broadcast %cst_6 : f32 to vector<16x256xf32>
    %9 = arith.mulf %8, %5 : vector<16x256xf32>
    %10 = arith.select %7, %5, %9 : vector<16x256xi1>, vector<16x256xf32>
    %11 = arith.truncf %10 : vector<16x256xf32> to vector<16x256xbf16>
    %c0_7 = arith.constant 0 : index
    %c0_8 = arith.constant 0 : index
    %12 = vector.load %arg4[%c0_7, %c0_8] : memref<256x128xbf16, #tpu.memory_space<vmem>>, vector<256x128xbf16>
    %c0_9 = arith.constant 0 : index
    %c0_10 = arith.constant 0 : index
    %13 = vector.load %arg5[%c0_9, %c0_10] : memref<1x128xf32, #tpu.memory_space<vmem>>, vector<1x128xf32>
    %cst_11 = arith.constant dense<0.000000e+00> : vector<16x128xf32>
    %14 = tpu.matmul %11, %12, %cst_11 {dimension_numbers = #tpu.dot_dimension_numbers<[1], [0], [0], [1], [0, 0, 1, 1], [], []>} : vector<16x256xbf16>, vector<256x128xbf16>, vector<16x128xf32> -> vector<16x128xf32>
    %15 = vector.broadcast %13 : vector<1x128xf32> to vector<16x128xf32>
    %16 = arith.addf %14, %15 : vector<16x128xf32>
    %cst_12 = arith.constant 0.000000e+00 : f32
    %17 = vector.broadcast %cst_12 : f32 to vector<16x128xf32>
    %18 = arith.cmpf oge, %16, %17 : vector<16x128xf32>
    %cst_13 = arith.constant 2.000000e-01 : f32
    %19 = vector.broadcast %cst_13 : f32 to vector<16x128xf32>
    %20 = arith.mulf %19, %16 : vector<16x128xf32>
    %21 = arith.select %18, %16, %20 : vector<16x128xi1>, vector<16x128xf32>
    %22 = arith.truncf %21 : vector<16x128xf32> to vector<16x128xbf16>
    %c0_14 = arith.constant 0 : index
    %c0_15 = arith.constant 0 : index
    %23 = vector.load %arg6[%c0_14, %c0_15] : memref<128x128xbf16, #tpu.memory_space<vmem>>, vector<128x128xbf16>
    %c0_16 = arith.constant 0 : index
    %c0_17 = arith.constant 0 : index
    %24 = vector.load %arg7[%c0_16, %c0_17] : memref<1x128xf32, #tpu.memory_space<vmem>>, vector<1x128xf32>
    %cst_18 = arith.constant dense<0.000000e+00> : vector<16x128xf32>
    %25 = tpu.matmul %22, %23, %cst_18 {dimension_numbers = #tpu.dot_dimension_numbers<[1], [0], [0], [1], [0, 0, 1, 1], [], []>} : vector<16x128xbf16>, vector<128x128xbf16>, vector<16x128xf32> -> vector<16x128xf32>
    %26 = vector.broadcast %24 : vector<1x128xf32> to vector<16x128xf32>
    %27 = arith.addf %25, %26 : vector<16x128xf32>
    %cst_19 = arith.constant 0.000000e+00 : f32
    %28 = vector.broadcast %cst_19 : f32 to vector<16x128xf32>
    %29 = arith.subf %28, %27 : vector<16x128xf32>
    %30 = math.exp %29 : vector<16x128xf32>
    %cst_20 = arith.constant 1.000000e+00 : f32
    %31 = vector.broadcast %cst_20 : f32 to vector<16x128xf32>
    %32 = arith.addf %31, %30 : vector<16x128xf32>
    %cst_21 = arith.constant 1.000000e+00 : f32
    %33 = vector.broadcast %cst_21 : f32 to vector<16x128xf32>
    %34 = arith.divf %33, %32 : vector<16x128xf32>
    %35 = arith.truncf %34 : vector<16x128xf32> to vector<16x128xbf16>
    %c0_22 = arith.constant 0 : index
    %c0_23 = arith.constant 0 : index
    %36 = vector.load %arg8[%c0_22, %c0_23] : memref<16x128xbf16, #tpu.memory_space<vmem>>, vector<16x128xbf16>
    tpu.vector_store %arg8[%c0_22, %c0_23], %35 {strides = array<i32>} : memref<16x128xbf16, #tpu.memory_space<vmem>>, vector<16x128xbf16>,
    return
  }
  func.func @transform_0(%arg0: i32) -> (i32, i32) {
    %c0_i32 = arith.constant 0 : i32
    %c0_i32_0 = arith.constant 0 : i32
    return %arg0, %c0_i32 : i32, i32
  }
  func.func @transform_1(%arg0: i32) -> (i32, i32) {
    %c0_i32 = arith.constant 0 : i32
    %c0_i32_0 = arith.constant 0 : i32
    %c0_i32_1 = arith.constant 0 : i32
    return %c0_i32, %c0_i32_0 : i32, i32
  }
  func.func @transform_2(%arg0: i32) -> (i32, i32) {
    %c0_i32 = arith.constant 0 : i32
    %c0_i32_0 = arith.constant 0 : i32
    %c0_i32_1 = arith.constant 0 : i32
    return %c0_i32, %c0_i32_0 : i32, i32
  }
  func.func @transform_3(%arg0: i32) -> (i32, i32) {
    %c0_i32 = arith.constant 0 : i32
    %c0_i32_0 = arith.constant 0 : i32
    %c0_i32_1 = arith.constant 0 : i32
    return %c0_i32, %c0_i32_0 : i32, i32
  }
  func.func @transform_4(%arg0: i32) -> (i32, i32) {
    %c0_i32 = arith.constant 0 : i32
    %c0_i32_0 = arith.constant 0 : i32
    %c0_i32_1 = arith.constant 0 : i32
    return %c0_i32, %c0_i32_0 : i32, i32
  }
  func.func @transform_5(%arg0: i32) -> (i32, i32) {
    %c0_i32 = arith.constant 0 : i32
    %c0_i32_0 = arith.constant 0 : i32
    %c0_i32_1 = arith.constant 0 : i32
    return %c0_i32, %c0_i32_0 : i32, i32
  }
  func.func @transform_6(%arg0: i32) -> (i32, i32) {
    %c0_i32 = arith.constant 0 : i32
    %c0_i32_0 = arith.constant 0 : i32
    %c0_i32_1 = arith.constant 0 : i32
    return %c0_i32, %c0_i32_0 : i32, i32
  }
  func.func @transform_7(%arg0: i32) -> (i32, i32) {
    %c0_i32 = arith.constant 0 : i32
    %c0_i32_0 = arith.constant 0 : i32
    return %arg0, %c0_i32 : i32, i32
  }
}

</mosaic_0001>

<llo_original>
// kernel: tpu_custom_call.1
$region0: #{tpu_custom_call.1}
  #allocation0 [shape = 'u32[]', space=smem, size = 0x4, offset = 0x4, fixed_abs, tag = 'smem constant byte address 0x4 - core index']
  #allocation1 [shape = 'u32[144,128]{1,0:T(1,128)}', space=vmem, size = 0x12000, scoped, tag = 'internal scratch']
  %s0 = inlined_call_operand.hbm [shape: bf16[16,784], index: 0, kind: input, shape index: {}]
  %s1 = inlined_call_operand.hbm [shape: bf16[784,256], index: 1, kind: input, shape index: {}]
  %s2 = inlined_call_operand.vmem [shape: f32[1,256], index: 2, kind: input, shape index: {}]
  %s3 = inlined_call_operand.hbm [shape: bf16[256,128], index: 3, kind: input, shape index: {}]
  %s4 = inlined_call_operand.vmem [shape: f32[1,128], index: 4, kind: input, shape index: {}]
  %s5 = inlined_call_operand.hbm [shape: bf16[128,128], index: 5, kind: input, shape index: {}]
  %s6 = inlined_call_operand.vmem [shape: f32[1,128], index: 6, kind: input, shape index: {}]
  %s7 = inlined_call_operand.hbm [shape: bf16[16,128], index: 7, kind: output, shape index: {}]
  %s8 = sld [smem:[#allocation0]]
  $region54: #{tpu_custom_call.1} parent=0
    _
  %s10 = ssub.s32 1, %s8
  %s11 = scalar_select 0, %s10, %s8
  $region1: #{tpu_custom_call.1} parent=0
    #allocation2 [shape = 'u8[28672]{0}', space=vmem, size = 0x7000, scoped, tag = 'input window, operand 0, single buffered']
    #allocation3 [shape = 's32[1]{0}', space=sflag, size = 0x4, scoped, tag = 'scoped memory for tpu_custom_call.1']
    #allocation4 [shape = 's32[1]{0}', space=sflag, size = 0x4, scoped, tag = 'scoped memory for tpu_custom_call.1']
    #allocation5 [shape = 'u8[401408]{0}', space=vmem, size = 0x62000, scoped, tag = 'input window, operand 1, single buffered']
    #allocation6 [shape = 's32[1]{0}', space=sflag, size = 0x4, scoped, tag = 'scoped memory for tpu_custom_call.1']
    #allocation7 [shape = 'u8[65536]{0}', space=vmem, size = 0x10000, scoped, tag = 'input window, operand 3, single buffered']
    #allocation8 [shape = 'u8[32768]{0}', space=vmem, size = 0x8000, scoped, tag = 'input window, operand 5, single buffered']
    #allocation9 [shape = 's32[1]{0}', space=sflag, size = 0x4, scoped, tag = 'scoped memory for tpu_custom_call.1']
    #allocation10 [shape = 'u8[4096]{0}', space=vmem, size = 0x1000, scoped, tag = 'output window, operand 0, single buffered']
    %12 = vsyncpa [#allocation3], 0
    %13 = vsyncpa [#allocation6], 0
    %14 = vsyncpa [#allocation9], 0
    %15 = vsyncpa [#allocation4], 0
    // Predicated region
    $region2: #{tpu_custom_call.1} parent=1 // pred_check
      _
    $region3: #{tpu_custom_call.1} parent=1 // pred_check_branch
      %17 = sbr.rel (0) target = $region5
    $region4: #{tpu_custom_call.1} parent=1 // pred_region
      %s19 = ssub.s32 896, 896
      %20 = vsyncadd [#allocation3], %s19
      %s21 = sshll.u32 [#allocation2], 4
      %s22 = int_to_ptr.vmem [resolvable:$true] %s21
      %27 = dma.hbm_to_vmem [thread:$0]  %s0, 896, %s22, [#allocation3], 448, 448, 28
    $region5: #{tpu_custom_call.1} parent=1 // pred_fallthru
      _
    // Predicated region
    $region6: #{tpu_custom_call.1} parent=1 // pred_check
      _
    $region7: #{tpu_custom_call.1} parent=1 // pred_check_branch
      %29 = sbr.rel (0) target = $region9
    $region8: #{tpu_custom_call.1} parent=1 // pred_region
      %s31 = ssub.s32 12544, 12544
      %32 = vsyncadd [#allocation6], %s31
      %s33 = sshll.u32 [#allocation5], 4
      %s34 = int_to_ptr.vmem [resolvable:$true] %s33
      %39 = dma.hbm_to_vmem [thread:$0]  %s1, 12544, %s34, [#allocation6], 128, 128, 8
    $region9: #{tpu_custom_call.1} parent=1 // pred_fallthru
      _
    // Predicated region
    $region10: #{tpu_custom_call.1} parent=1 // pred_check
      _
    $region11: #{tpu_custom_call.1} parent=1 // pred_check_branch
      %41 = sbr.rel (0) target = $region13
    $region12: #{tpu_custom_call.1} parent=1 // pred_region
      _
    $region13: #{tpu_custom_call.1} parent=1 // pred_fallthru
      _
    // Predicated region
    $region14: #{tpu_custom_call.1} parent=1 // pred_check
      _
    $region15: #{tpu_custom_call.1} parent=1 // pred_check_branch
      %43 = sbr.rel (0) target = $region17
    $region16: #{tpu_custom_call.1} parent=1 // pred_region
      %s45 = ssub.s32 2048, 2048
      %46 = vsyncadd [#allocation6], %s45
      %s47 = sshll.u32 [#allocation7], 4
      %s48 = int_to_ptr.vmem [resolvable:$true] %s47
      %53 = dma.hbm_to_vmem [thread:$0]  %s3, 2048, %s48, [#allocation6], 64, 64, 4
    $region17: #{tpu_custom_call.1} parent=1 // pred_fallthru
      _
    // Predicated region
    $region18: #{tpu_custom_call.1} parent=1 // pred_check
      _
    $region19: #{tpu_custom_call.1} parent=1 // pred_check_branch
      %55 = sbr.rel (0) target = $region21
    $region20: #{tpu_custom_call.1} parent=1 // pred_region
      _
    $region21: #{tpu_custom_call.1} parent=1 // pred_fallthru
      _
    // Predicated region
    $region22: #{tpu_custom_call.1} parent=1 // pred_check
      _
    $region23: #{tpu_custom_call.1} parent=1 // pred_check_branch
      %57 = sbr.rel (0) target = $region25
    $region24: #{tpu_custom_call.1} parent=1 // pred_region
      %s59 = ssub.s32 1024, 1024
      %60 = vsyncadd [#allocation9], %s59
      %s61 = sshll.u32 [#allocation8], 4
      %s62 = int_to_ptr.vmem [resolvable:$true] %s61
      %67 = dma.hbm_to_vmem [thread:$0]  %s5, 1024, %s62, [#allocation9], 64, 64, 4
    $region25: #{tpu_custom_call.1} parent=1 // pred_fallthru
      _
    // Predicated region
    $region26: #{tpu_custom_call.1} parent=1 // pred_check
      _
    $region27: #{tpu_custom_call.1} parent=1 // pred_check_branch
      %69 = sbr.rel (0) target = $region29
    $region28: #{tpu_custom_call.1} parent=1 // pred_region
      _
    $region29: #{tpu_custom_call.1} parent=1 // pred_fallthru
      _
    // Predicated region
    $region30: #{tpu_custom_call.1} parent=1 // pred_check
      _
    $region31: #{tpu_custom_call.1} parent=1 // pred_check_branch
      %71 = sbr.rel (0) target = $region33
    $region32: #{tpu_custom_call.1} parent=1 // pred_region
      %72 = dma.done [#allocation3], 896
    $region33: #{tpu_custom_call.1} parent=1 // pred_fallthru
      _
    // Predicated region
    $region34: #{tpu_custom_call.1} parent=1 // pred_check
      _
    $region35: #{tpu_custom_call.1} parent=1 // pred_check_branch
      %74 = sbr.rel (0) target = $region37
    $region36: #{tpu_custom_call.1} parent=1 // pred_region
      %75 = dma.done [#allocation6], 12544
    $region37: #{tpu_custom_call.1} parent=1 // pred_fallthru
      _
    // Predicated region
    $region38: #{tpu_custom_call.1} parent=1 // pred_check
      _
    $region39: #{tpu_custom_call.1} parent=1 // pred_check_branch
      %77 = sbr.rel (0) target = $region41
    $region40: #{tpu_custom_call.1} parent=1 // pred_region
      %78 = dma.done [#allocation6], 2048
    $region41: #{tpu_custom_call.1} parent=1 // pred_fallthru
      _
    // Predicated region
    $region42: #{tpu_custom_call.1} parent=1 // pred_check
      _
    $region43: #{tpu_custom_call.1} parent=1 // pred_check_branch
      %80 = sbr.rel (0) target = $region45
    $region44: #{tpu_custom_call.1} parent=1 // pred_region
      %81 = dma.done [#allocation9], 1024
    $region45: #{tpu_custom_call.1} parent=1 // pred_fallthru
      _
    %v83 = vld [vmem:[#allocation2] sm:$0xff]
    %v84 = vld [vmem:[#allocation2 + $0x8] sm:$0xff]
    %v85 = vld [vmem:[#allocation2 + $0x10] sm:$0xff]
    %v86 = vld [vmem:[#allocation2 + $0x18] sm:$0xf]
    %v87 = vld [vmem:[#allocation2 + $0x1c] sm:$0xff]
    %v88 = vld [vmem:[#allocation2 + $0x24] sm:$0xff]
    %v89 = vld [vmem:[#allocation2 + $0x2c] sm:$0xff]
    %v90 = vld [vmem:[#allocation2 + $0x34] sm:$0xf]
    %v91 = vld [vmem:[#allocation5] sm:$0xff]
    %v92 = vld [vmem:[#allocation5 + $0x8] sm:$0xff]
    %v93 = vld [vmem:[#allocation5 + $0x10] sm:$0xff]
    %v94 = vld [vmem:[#allocation5 + $0x18] sm:$0xff]
    %v95 = vld [vmem:[#allocation5 + $0x20] sm:$0xff]
    %v96 = vld [vmem:[#allocation5 + $0x28] sm:$0xff]
    %v97 = vld [vmem:[#allocation5 + $0x30] sm:$0xff]
    %v98 = vld [vmem:[#allocation5 + $0x38] sm:$0xff]
    %v99 = vld [vmem:[#allocation5 + $0x40] sm:$0xff]
    %v100 = vld [vmem:[#allocation5 + $0x48] sm:$0xff]
    %v101 = vld [vmem:[#allocation5 + $0x50] sm:$0xff]
    %v102 = vld [vmem:[#allocation5 + $0x58] sm:$0xff]
    %v103 = vld [vmem:[#allocation5 + $0x60] sm:$0xff]
    %v104 = vld [vmem:[#allocation5 + $0x68] sm:$0xff]
    %v105 = vld [vmem:[#allocation5 + $0x70] sm:$0xff]
    %v106 = vld [vmem:[#allocation5 + $0x78] sm:$0xff]
    %v107 = vld [vmem:[#allocation5 + $0x80] sm:$0xff]
    %v108 = vld [vmem:[#allocation5 + $0x88] sm:$0xff]
    %v109 = vld [vmem:[#allocation5 + $0x90] sm:$0xff]
    %v110 = vld [vmem:[#allocation5 + $0x98] sm:$0xff]
    %v111 = vld [vmem:[#allocation5 + $0xa0] sm:$0xff]
    %v112 = vld [vmem:[#allocation5 + $0xa8] sm:$0xff]
    %v113 = vld [vmem:[#allocation5 + $0xb0] sm:$0xff]
    %v114 = vld [vmem:[#allocation5 + $0xb8] sm:$0xff]
    %v115 = vld [vmem:[#allocation5 + $0xc0] sm:$0xff]
    %v116 = vld [vmem:[#allocation5 + $0xc8] sm:$0xff]
    %v117 = vld [vmem:[#allocation5 + $0xd0] sm:$0xff]
    %v118 = vld [vmem:[#allocation5 + $0xd8] sm:$0xff]
    %v119 = vld [vmem:[#allocation5 + $0xe0] sm:$0xff]
    %v120 = vld [vmem:[#allocation5 + $0xe8] sm:$0xff]
    %v121 = vld [vmem:[#allocation5 + $0xf0] sm:$0xff]
    %v122 = vld [vmem:[#allocation5 + $0xf8] sm:$0xff]
    %v123 = vld [vmem:[#allocation5 + $0x100] sm:$0xff]
    %v124 = vld [vmem:[#allocation5 + $0x108] sm:$0xff]
    %v125 = vld [vmem:[#allocation5 + $0x110] sm:$0xff]
    %v126 = vld [vmem:[#allocation5 + $0x118] sm:$0xff]
    %v127 = vld [vmem:[#allocation5 + $0x120] sm:$0xff]
    %v128 = vld [vmem:[#allocation5 + $0x128] sm:$0xff]
    %v129 = vld [vmem:[#allocation5 + $0x130] sm:$0xff]
    %v130 = vld [vmem:[#allocation5 + $0x138] sm:$0xff]
    %v131 = vld [vmem:[#allocation5 + $0x140] sm:$0xff]
    %v132 = vld [vmem:[#allocation5 + $0x148] sm:$0xff]
    %v133 = vld [vmem:[#allocation5 + $0x150] sm:$0xff]
    %v134 = vld [vmem:[#allocation5 + $0x158] sm:$0xff]
    %v135 = vld [vmem:[#allocation5 + $0x160] sm:$0xff]
    %v136 = vld [vmem:[#allocation5 + $0x168] sm:$0xff]
    %v137 = vld [vmem:[#allocation5 + $0x170] sm:$0xff]
    %v138 = vld [vmem:[#allocation5 + $0x178] sm:$0xff]
    %v139 = vld [vmem:[#allocation5 + $0x180] sm:$0xff]
    %v140 = vld [vmem:[#allocation5 + $0x188] sm:$0xff]
    %v141 = vld [vmem:[#allocation5 + $0x190] sm:$0xff]
    %v142 = vld [vmem:[#allocation5 + $0x198] sm:$0xff]
    %v143 = vld [vmem:[#allocation5 + $0x1a0] sm:$0xff]
    %v144 = vld [vmem:[#allocation5 + $0x1a8] sm:$0xff]
    %v145 = vld [vmem:[#allocation5 + $0x1b0] sm:$0xff]
    %v146 = vld [vmem:[#allocation5 + $0x1b8] sm:$0xff]
    %v147 = vld [vmem:[#allocation5 + $0x1c0] sm:$0xff]
    %v148 = vld [vmem:[#allocation5 + $0x1c8] sm:$0xff]
    %v149 = vld [vmem:[#allocation5 + $0x1d0] sm:$0xff]
    %v150 = vld [vmem:[#allocation5 + $0x1d8] sm:$0xff]
    %v151 = vld [vmem:[#allocation5 + $0x1e0] sm:$0xff]
    %v152 = vld [vmem:[#allocation5 + $0x1e8] sm:$0xff]
    %v153 = vld [vmem:[#allocation5 + $0x1f0] sm:$0xff]
    %v154 = vld [vmem:[#allocation5 + $0x1f8] sm:$0xff]
    %v155 = vld [vmem:[#allocation5 + $0x200] sm:$0xff]
    %v156 = vld [vmem:[#allocation5 + $0x208] sm:$0xff]
    %v157 = vld [vmem:[#allocation5 + $0x210] sm:$0xff]
    %v158 = vld [vmem:[#allocation5 + $0x218] sm:$0xff]
    %v159 = vld [vmem:[#allocation5 + $0x220] sm:$0xff]
    %v160 = vld [vmem:[#allocation5 + $0x228] sm:$0xff]
    %v161 = vld [vmem:[#allocation5 + $0x230] sm:$0xff]
    %v162 = vld [vmem:[#allocation5 + $0x238] sm:$0xff]
    %v163 = vld [vmem:[#allocation5 + $0x240] sm:$0xff]
    %v164 = vld [vmem:[#allocation5 + $0x248] sm:$0xff]
    %v165 = vld [vmem:[#allocation5 + $0x250] sm:$0xff]
    %v166 = vld [vmem:[#allocation5 + $0x258] sm:$0xff]
    %v167 = vld [vmem:[#allocation5 + $0x260] sm:$0xff]
    %v168 = vld [vmem:[#allocation5 + $0x268] sm:$0xff]
    %v169 = vld [vmem:[#allocation5 + $0x270] sm:$0xff]
    %v170 = vld [vmem:[#allocation5 + $0x278] sm:$0xff]
    %v171 = vld [vmem:[#allocation5 + $0x280] sm:$0xff]
    %v172 = vld [vmem:[#allocation5 + $0x288] sm:$0xff]
    %v173 = vld [vmem:[#allocation5 + $0x290] sm:$0xff]
    %v174 = vld [vmem:[#allocation5 + $0x298] sm:$0xff]
    %v175 = vld [vmem:[#allocation5 + $0x2a0] sm:$0xff]
    %v176 = vld [vmem:[#allocation5 + $0x2a8] sm:$0xff]
    %v177 = vld [vmem:[#allocation5 + $0x2b0] sm:$0xff]
    %v178 = vld [vmem:[#allocation5 + $0x2b8] sm:$0xff]
    %v179 = vld [vmem:[#allocation5 + $0x2c0] sm:$0xff]
    %v180 = vld [vmem:[#allocation5 + $0x2c8] sm:$0xff]
    %v181 = vld [vmem:[#allocation5 + $0x2d0] sm:$0xff]
    %v182 = vld [vmem:[#allocation5 + $0x2d8] sm:$0xff]
    %v183 = vld [vmem:[#allocation5 + $0x2e0] sm:$0xff]
    %v184 = vld [vmem:[#allocation5 + $0x2e8] sm:$0xff]
    %v185 = vld [vmem:[#allocation5 + $0x2f0] sm:$0xff]
    %v186 = vld [vmem:[#allocation5 + $0x2f8] sm:$0xff]
    %v187 = vld [vmem:[#allocation5 + $0x300] sm:$0xff]
    %v188 = vld [vmem:[#allocation5 + $0x308] sm:$0xff]
    %v189 = vld [vmem:[%s2] sm:$0x3]
    %v191 = vlaneseq
    %v192 = vshrl.u32 %v191, 7
    %v193 = vsub.s32 0, %v192
    %v194 = vrot.slane %v189, %v193
    %v195 = vlaneseq
    %v196 = vshrl.u32 %v195, 7
    %v197 = vsub.s32 1, %v196
    %v198 = vrot.slane %v189, %v197
    %v209 = vunpack.c.l.b16 %v83
    %v210 = vunpack.c.h.b16 %v83
    %v211 = vunpack.c.l.b16 %v84
    %v212 = vunpack.c.h.b16 %v84
    %v213 = vunpack.c.l.b16 %v85
    %v214 = vunpack.c.h.b16 %v85
    %v215 = vunpack.c.l.b16 %v86
    %v216 = vunpack.c.l.b16 %v87
    %v217 = vunpack.c.h.b16 %v87
    %v218 = vunpack.c.l.b16 %v88
    %v219 = vunpack.c.h.b16 %v88
    %v220 = vunpack.c.l.b16 %v89
    %v221 = vunpack.c.h.b16 %v89
    %v222 = vunpack.c.l.b16 %v90
    %v223 = vpack.c.b16 %v216, %v209
    %v224 = vpack.c.b16 %v217, %v210
    %v225 = vpack.c.b16 %v218, %v211
    %v226 = vpack.c.b16 %v219, %v212
    %v227 = vpack.c.b16 %v220, %v213
    %v228 = vpack.c.b16 %v221, %v214
    %v229 = vpack.c.b16 %v222, %v215
    %v334 = vunpack.c.l.b16 %v91
    %v335 = vunpack.c.h.b16 %v91
    %v336 = vunpack.c.l.b16 %v92
    %v337 = vunpack.c.h.b16 %v92
    %v338 = vunpack.c.l.b16 %v93
    %v339 = vunpack.c.h.b16 %v93
    %v340 = vunpack.c.l.b16 %v94
    %v341 = vunpack.c.h.b16 %v94
    %v342 = vunpack.c.l.b16 %v95
    %v343 = vunpack.c.h.b16 %v95
    %v344 = vunpack.c.l.b16 %v96
    %v345 = vunpack.c.h.b16 %v96
    %v346 = vunpack.c.l.b16 %v97
    %v347 = vunpack.c.h.b16 %v97
    %v348 = vunpack.c.l.b16 %v98
    %v349 = vunpack.c.h.b16 %v98
    %v350 = vunpack.c.l.b16 %v99
    %v351 = vunpack.c.h.b16 %v99
    %v352 = vunpack.c.l.b16 %v100
    %v353 = vunpack.c.h.b16 %v100
    %v354 = vunpack.c.l.b16 %v101
    %v355 = vunpack.c.h.b16 %v101
    %v356 = vunpack.c.l.b16 %v102
    %v357 = vunpack.c.h.b16 %v102
    %v358 = vunpack.c.l.b16 %v103
    %v359 = vunpack.c.h.b16 %v103
    %v360 = vunpack.c.l.b16 %v104
    %v361 = vunpack.c.h.b16 %v104
    %v362 = vunpack.c.l.b16 %v105
    %v363 = vunpack.c.h.b16 %v105
    %v364 = vunpack.c.l.b16 %v106
    %v365 = vunpack.c.h.b16 %v106
    %v366 = vunpack.c.l.b16 %v107
    %v367 = vunpack.c.h.b16 %v107
    %v368 = vunpack.c.l.b16 %v108
    %v369 = vunpack.c.h.b16 %v108
    %v370 = vunpack.c.l.b16 %v109
    %v371 = vunpack.c.h.b16 %v109
    %v372 = vunpack.c.l.b16 %v110
    %v373 = vunpack.c.h.b16 %v110
    %v374 = vunpack.c.l.b16 %v111
    %v375 = vunpack.c.h.b16 %v111
    %v376 = vunpack.c.l.b16 %v112
    %v377 = vunpack.c.h.b16 %v112
    %v378 = vunpack.c.l.b16 %v113
    %v379 = vunpack.c.h.b16 %v113
    %v380 = vunpack.c.l.b16 %v114
    %v381 = vunpack.c.h.b16 %v114
    %v382 = vunpack.c.l.b16 %v115
    %v383 = vunpack.c.h.b16 %v115
    %v384 = vunpack.c.l.b16 %v116
    %v385 = vunpack.c.h.b16 %v116
    %v386 = vunpack.c.l.b16 %v117
    %v387 = vunpack.c.h.b16 %v117
    %v388 = vunpack.c.l.b16 %v118
    %v389 = vunpack.c.h.b16 %v118
    %v390 = vunpack.c.l.b16 %v119
    %v391 = vunpack.c.h.b16 %v119
    %v392 = vunpack.c.l.b16 %v120
    %v393 = vunpack.c.h.b16 %v120
    %v394 = vunpack.c.l.b16 %v121
    %v395 = vunpack.c.h.b16 %v121
    %v396 = vunpack.c.l.b16 %v122
    %v397 = vunpack.c.h.b16 %v122
    %v398 = vunpack.c.l.b16 %v123
    %v399 = vunpack.c.h.b16 %v123
    %v400 = vunpack.c.l.b16 %v124
    %v401 = vunpack.c.h.b16 %v124
    %v402 = vunpack.c.l.b16 %v125
    %v403 = vunpack.c.h.b16 %v125
    %v404 = vunpack.c.l.b16 %v126
    %v405 = vunpack.c.h.b16 %v126
    %v406 = vunpack.c.l.b16 %v127
    %v407 = vunpack.c.h.b16 %v127
    %v408 = vunpack.c.l.b16 %v128
    %v409 = vunpack.c.h.b16 %v128
    %v410 = vunpack.c.l.b16 %v129
    %v411 = vunpack.c.h.b16 %v129
    %v412 = vunpack.c.l.b16 %v130
    %v413 = vunpack.c.h.b16 %v130
    %v414 = vunpack.c.l.b16 %v131
    %v415 = vunpack.c.h.b16 %v131
    %v416 = vunpack.c.l.b16 %v132
    %v417 = vunpack.c.h.b16 %v132
    %v418 = vunpack.c.l.b16 %v133
    %v419 = vunpack.c.h.b16 %v133
    %v420 = vunpack.c.l.b16 %v134
    %v421 = vunpack.c.h.b16 %v134
    %v422 = vunpack.c.l.b16 %v135
    %v423 = vunpack.c.h.b16 %v135
    %v424 = vunpack.c.l.b16 %v136
    %v425 = vunpack.c.h.b16 %v136
    %v426 = vunpack.c.l.b16 %v137
    %v427 = vunpack.c.h.b16 %v137
    %v428 = vunpack.c.l.b16 %v138
    %v429 = vunpack.c.h.b16 %v138
    %v430 = vunpack.c.l.b16 %v139
    %v431 = vunpack.c.h.b16 %v139
    %v432 = vunpack.c.l.b16 %v140
    %v433 = vunpack.c.h.b16 %v140
    %v434 = vunpack.c.l.b16 %v141
    %v435 = vunpack.c.h.b16 %v141
    %v436 = vunpack.c.l.b16 %v142
    %v437 = vunpack.c.h.b16 %v142
    %v438 = vunpack.c.l.b16 %v143
    %v439 = vunpack.c.h.b16 %v143
    %v440 = vunpack.c.l.b16 %v144
    %v441 = vunpack.c.h.b16 %v144
    %v442 = vunpack.c.l.b16 %v145
    %v443 = vunpack.c.h.b16 %v145
    %v444 = vunpack.c.l.b16 %v146
    %v445 = vunpack.c.h.b16 %v146
    %v446 = vunpack.c.l.b16 %v147
    %v447 = vunpack.c.h.b16 %v147
    %v448 = vunpack.c.l.b16 %v148
    %v449 = vunpack.c.h.b16 %v148
    %v450 = vunpack.c.l.b16 %v149
    %v451 = vunpack.c.h.b16 %v149
    %v452 = vunpack.c.l.b16 %v150
    %v453 = vunpack.c.h.b16 %v150
    %v454 = vunpack.c.l.b16 %v151
    %v455 = vunpack.c.h.b16 %v151
    %v456 = vunpack.c.l.b16 %v152
    %v457 = vunpack.c.h.b16 %v152
    %v458 = vunpack.c.l.b16 %v153
    %v459 = vunpack.c.h.b16 %v153
    %v460 = vunpack.c.l.b16 %v154
    %v461 = vunpack.c.h.b16 %v154
    %v462 = vunpack.c.l.b16 %v155
    %v463 = vunpack.c.h.b16 %v155
    %v464 = vunpack.c.l.b16 %v156
    %v465 = vunpack.c.h.b16 %v156
    %v466 = vunpack.c.l.b16 %v157
    %v467 = vunpack.c.h.b16 %v157
    %v468 = vunpack.c.l.b16 %v158
    %v469 = vunpack.c.h.b16 %v158
    %v470 = vunpack.c.l.b16 %v159
    %v471 = vunpack.c.h.b16 %v159
    %v472 = vunpack.c.l.b16 %v160
    %v473 = vunpack.c.h.b16 %v160
    %v474 = vunpack.c.l.b16 %v161
    %v475 = vunpack.c.h.b16 %v161
    %v476 = vunpack.c.l.b16 %v162
    %v477 = vunpack.c.h.b16 %v162
    %v478 = vunpack.c.l.b16 %v163
    %v479 = vunpack.c.h.b16 %v163
    %v480 = vunpack.c.l.b16 %v164
    %v481 = vunpack.c.h.b16 %v164
    %v482 = vunpack.c.l.b16 %v165
    %v483 = vunpack.c.h.b16 %v165
    %v484 = vunpack.c.l.b16 %v166
    %v485 = vunpack.c.h.b16 %v166
    %v486 = vunpack.c.l.b16 %v167
    %v487 = vunpack.c.h.b16 %v167
    %v488 = vunpack.c.l.b16 %v168
    %v489 = vunpack.c.h.b16 %v168
    %v490 = vunpack.c.l.b16 %v169
    %v491 = vunpack.c.h.b16 %v169
    %v492 = vunpack.c.l.b16 %v170
    %v493 = vunpack.c.h.b16 %v170
    %v494 = vunpack.c.l.b16 %v171
    %v495 = vunpack.c.h.b16 %v171
    %v496 = vunpack.c.l.b16 %v172
    %v497 = vunpack.c.h.b16 %v172
    %v498 = vunpack.c.l.b16 %v173
    %v499 = vunpack.c.h.b16 %v173
    %v500 = vunpack.c.l.b16 %v174
    %v501 = vunpack.c.h.b16 %v174
    %v502 = vunpack.c.l.b16 %v175
    %v503 = vunpack.c.h.b16 %v175
    %v504 = vunpack.c.l.b16 %v176
    %v505 = vunpack.c.h.b16 %v176
    %v506 = vunpack.c.l.b16 %v177
    %v507 = vunpack.c.h.b16 %v177
    %v508 = vunpack.c.l.b16 %v178
    %v509 = vunpack.c.h.b16 %v178
    %v510 = vunpack.c.l.b16 %v179
    %v511 = vunpack.c.h.b16 %v179
    %v512 = vunpack.c.l.b16 %v180
    %v513 = vunpack.c.h.b16 %v180
    %v514 = vunpack.c.l.b16 %v181
    %v515 = vunpack.c.h.b16 %v181
    %v516 = vunpack.c.l.b16 %v182
    %v517 = vunpack.c.h.b16 %v182
    %v518 = vunpack.c.l.b16 %v183
    %v519 = vunpack.c.h.b16 %v183
    %v520 = vunpack.c.l.b16 %v184
    %v521 = vunpack.c.h.b16 %v184
    %v522 = vunpack.c.l.b16 %v185
    %v523 = vunpack.c.h.b16 %v185
    %v524 = vunpack.c.l.b16 %v186
    %v525 = vunpack.c.h.b16 %v186
    %v526 = vunpack.c.l.b16 %v187
    %v527 = vunpack.c.h.b16 %v187
    %v528 = vunpack.c.l.b16 %v188
    %v529 = vunpack.c.h.b16 %v188
    %v530 = vpack.c.b16 %v336, %v334
    %v531 = vpack.c.b16 %v337, %v335
    %v532 = vpack.c.b16 %v340, %v338
    %v533 = vpack.c.b16 %v341, %v339
    %v534 = vpack.c.b16 %v344, %v342
    %v535 = vpack.c.b16 %v345, %v343
    %v536 = vpack.c.b16 %v348, %v346
    %v537 = vpack.c.b16 %v349, %v347
    %v538 = vpack.c.b16 %v352, %v350
    %v539 = vpack.c.b16 %v353, %v351
    %v540 = vpack.c.b16 %v356, %v354
    %v541 = vpack.c.b16 %v357, %v355
    %v542 = vpack.c.b16 %v360, %v358
    %v543 = vpack.c.b16 %v361, %v359
    %v544 = vpack.c.b16 %v364, %v362
    %v545 = vpack.c.b16 %v365, %v363
    %v546 = vpack.c.b16 %v368, %v366
    %v547 = vpack.c.b16 %v369, %v367
    %v548 = vpack.c.b16 %v372, %v370
    %v549 = vpack.c.b16 %v373, %v371
    %v550 = vpack.c.b16 %v376, %v374
    %v551 = vpack.c.b16 %v377, %v375
    %v552 = vpack.c.b16 %v380, %v378
    %v553 = vpack.c.b16 %v381, %v379
    %v554 = vpack.c.b16 %v384, %v382
    %v555 = vpack.c.b16 %v385, %v383
    %v556 = vpack.c.b16 %v388, %v386
    %v557 = vpack.c.b16 %v389, %v387
    %v558 = vpack.c.b16 %v392, %v390
    %v559 = vpack.c.b16 %v393, %v391
    %v560 = vpack.c.b16 %v396, %v394
    %v561 = vpack.c.b16 %v397, %v395
    %v562 = vpack.c.b16 %v400, %v398
    %v563 = vpack.c.b16 %v401, %v399
    %v564 = vpack.c.b16 %v404, %v402
    %v565 = vpack.c.b16 %v405, %v403
    %v566 = vpack.c.b16 %v408, %v406
    %v567 = vpack.c.b16 %v409, %v407
    %v568 = vpack.c.b16 %v412, %v410
    %v569 = vpack.c.b16 %v413, %v411
    %v570 = vpack.c.b16 %v416, %v414
    %v571 = vpack.c.b16 %v417, %v415
    %v572 = vpack.c.b16 %v420, %v418
    %v573 = vpack.c.b16 %v421, %v419
    %v574 = vpack.c.b16 %v424, %v422
    %v575 = vpack.c.b16 %v425, %v423
    %v576 = vpack.c.b16 %v428, %v426
    %v577 = vpack.c.b16 %v429, %v427
    %v578 = vpack.c.b16 %v432, %v430
    %v579 = vpack.c.b16 %v433, %v431
    %v580 = vpack.c.b16 %v436, %v434
    %v581 = vpack.c.b16 %v437, %v435
    %v582 = vpack.c.b16 %v440, %v438
    %v583 = vpack.c.b16 %v441, %v439
    %v584 = vpack.c.b16 %v444, %v442
    %v585 = vpack.c.b16 %v445, %v443
    %v586 = vpack.c.b16 %v448, %v446
    %v587 = vpack.c.b16 %v449, %v447
    %v588 = vpack.c.b16 %v452, %v450
    %v589 = vpack.c.b16 %v453, %v451
    %v590 = vpack.c.b16 %v456, %v454
    %v591 = vpack.c.b16 %v457, %v455
    %v592 = vpack.c.b16 %v460, %v458
    %v593 = vpack.c.b16 %v461, %v459
    %v594 = vpack.c.b16 %v464, %v462
    %v595 = vpack.c.b16 %v465, %v463
    %v596 = vpack.c.b16 %v468, %v466
    %v597 = vpack.c.b16 %v469, %v467
    %v598 = vpack.c.b16 %v472, %v470
    %v599 = vpack.c.b16 %v473, %v471
    %v600 = vpack.c.b16 %v476, %v474
    %v601 = vpack.c.b16 %v477, %v475
    %v602 = vpack.c.b16 %v480, %v478
    %v603 = vpack.c.b16 %v481, %v479
    %v604 = vpack.c.b16 %v484, %v482
    %v605 = vpack.c.b16 %v485, %v483
    %v606 = vpack.c.b16 %v488, %v486
    %v607 = vpack.c.b16 %v489, %v487
    %v608 = vpack.c.b16 %v492, %v490
    %v609 = vpack.c.b16 %v493, %v491
    %v610 = vpack.c.b16 %v496, %v494
    %v611 = vpack.c.b16 %v497, %v495
    %v612 = vpack.c.b16 %v500, %v498
    %v613 = vpack.c.b16 %v501, %v499
    %v614 = vpack.c.b16 %v504, %v502
    %v615 = vpack.c.b16 %v505, %v503
    %v616 = vpack.c.b16 %v508, %v506
    %v617 = vpack.c.b16 %v509, %v507
    %v618 = vpack.c.b16 %v512, %v510
    %v619 = vpack.c.b16 %v513, %v511
    %v620 = vpack.c.b16 %v516, %v514
    %v621 = vpack.c.b16 %v517, %v515
    %v622 = vpack.c.b16 %v520, %v518
    %v623 = vpack.c.b16 %v521, %v519
    %v624 = vpack.c.b16 %v524, %v522
    %v625 = vpack.c.b16 %v525, %v523
    %v626 = vpack.c.b16 %v528, %v526
    %v627 = vpack.c.b16 %v529, %v527
    %vm726 = vcmask 130048
    %v728 = vsel %vm726, %v229, 0
    %730 = vmatprep.subr.bf16.mxu0 %v545
    %731 = vmatpush1.bf16.msra.mxu0 %v544
    %732 = vmatprep.subr.bf16.mxu0 %v543
    %733 = vmatpush1.bf16.msra.mxu0 %v542
    %734 = vmatprep.subr.bf16.mxu0 %v541
    %735 = vmatpush1.bf16.msra.mxu0 %v540
    %736 = vmatprep.subr.bf16.mxu0 %v539
    %737 = vmatpush1.bf16.msra.mxu0 %v538
    %738 = vmatprep.subr.bf16.mxu0 %v537
    %739 = vmatpush1.bf16.msra.mxu0 %v536
    %740 = vmatprep.subr.bf16.mxu0 %v535
    %741 = vmatpush1.bf16.msra.mxu0 %v534
    %742 = vmatprep.subr.bf16.mxu0 %v533
    %743 = vmatpush1.bf16.msra.mxu0 %v532
    %744 = vmatprep.subr.bf16.mxu0 %v531
    %745 = vmatpush1.bf16.msra.mxu0 %v530
    %746 = vmatprep.subr.bf16.mxu0 %v561
    %747 = vmatpush2.bf16.msra.mxu0 %v560
    %748 = vmatprep.subr.bf16.mxu0 %v559
    %749 = vmatpush2.bf16.msra.mxu0 %v558
    %750 = vmatprep.subr.bf16.mxu0 %v557
    %751 = vmatpush2.bf16.msra.mxu0 %v556
    %752 = vmatprep.subr.bf16.mxu0 %v555
    %753 = vmatpush2.bf16.msra.mxu0 %v554
    %754 = vmatprep.subr.bf16.mxu0 %v553
    %755 = vmatpush2.bf16.msra.mxu0 %v552
    %756 = vmatprep.subr.bf16.mxu0 %v551
    %757 = vmatpush2.bf16.msra.mxu0 %v550
    %758 = vmatprep.subr.bf16.mxu0 %v549
    %759 = vmatpush2.bf16.msra.mxu0 %v548
    %760 = vmatprep.subr.bf16.mxu0 %v547
    %761 = vmatpush2.bf16.msra.mxu0 %v546
    %762 = vmatprep.mubr.bf16.mxu0 %v224
    %763 = vmatmul.mubr.bf16.gmra.mxu0 %v223
    %v764 = vpop.f32.mrf.mxu0
    %v765 = vadd.f32 %v194, %v764
    %v766 = vpop.f32.mrf.mxu0
    %v767 = vadd.f32 %v198, %v766
    %v768 = vpop.f32.mrf.mxu0
    %v769 = vadd.f32 %v194, %v768
    %v770 = vpop.f32.mrf.mxu0
    %v771 = vadd.f32 %v198, %v770
    %772 = vdwg.mxu0
    %773 = vmatprep.subr.bf16.mxu0 %v577
    %774 = vmatpush1.bf16.msra.mxu0 %v576
    %775 = vmatprep.subr.bf16.mxu0 %v575
    %776 = vmatpush1.bf16.msra.mxu0 %v574
    %777 = vmatprep.subr.bf16.mxu0 %v573
    %778 = vmatpush1.bf16.msra.mxu0 %v572
    %779 = vmatprep.subr.bf16.mxu0 %v571
    %780 = vmatpush1.bf16.msra.mxu0 %v570
    %781 = vmatprep.subr.bf16.mxu0 %v569
    %782 = vmatpush1.bf16.msra.mxu0 %v568
    %783 = vmatprep.subr.bf16.mxu0 %v567
    %784 = vmatpush1.bf16.msra.mxu0 %v566
    %785 = vmatprep.subr.bf16.mxu0 %v565
    %786 = vmatpush1.bf16.msra.mxu0 %v564
    %787 = vmatprep.subr.bf16.mxu0 %v563
    %788 = vmatpush1.bf16.msra.mxu0 %v562
    %789 = vmatprep.subr.bf16.mxu0 %v593
    %790 = vmatpush2.bf16.msra.mxu0 %v592
    %791 = vmatprep.subr.bf16.mxu0 %v591
    %792 = vmatpush2.bf16.msra.mxu0 %v590
    %793 = vmatprep.subr.bf16.mxu0 %v589
    %794 = vmatpush2.bf16.msra.mxu0 %v588
    %795 = vmatprep.subr.bf16.mxu0 %v587
    %796 = vmatpush2.bf16.msra.mxu0 %v586
    %797 = vmatprep.subr.bf16.mxu0 %v585
    %798 = vmatpush2.bf16.msra.mxu0 %v584
    %799 = vmatprep.subr.bf16.mxu0 %v583
    %800 = vmatpush2.bf16.msra.mxu0 %v582
    %801 = vmatprep.subr.bf16.mxu0 %v581
    %802 = vmatpush2.bf16.msra.mxu0 %v580
    %803 = vmatprep.subr.bf16.mxu0 %v579
    %804 = vmatpush2.bf16.msra.mxu0 %v578
    %805 = vmatprep.mubr.bf16.mxu0 %v226
    %806 = vmatmul.mubr.bf16.gmra.mxu0 %v225
    %v807 = vpop.f32.mrf.mxu0
    %v808 = vadd.f32 %v765, %v807
    %v809 = vpop.f32.mrf.mxu0
    %v810 = vadd.f32 %v767, %v809
    %v811 = vpop.f32.mrf.mxu0
    %v812 = vadd.f32 %v769, %v811
    %v813 = vpop.f32.mrf.mxu0
    %v814 = vadd.f32 %v771, %v813
    %815 = vdwg.mxu0
    %816 = vmatprep.subr.bf16.mxu0 %v609
    %817 = vmatpush1.bf16.msra.mxu0 %v608
    %818 = vmatprep.subr.bf16.mxu0 %v607
    %819 = vmatpush1.bf16.msra.mxu0 %v606
    %820 = vmatprep.subr.bf16.mxu0 %v605
    %821 = vmatpush1.bf16.msra.mxu0 %v604
    %822 = vmatprep.subr.bf16.mxu0 %v603
    %823 = vmatpush1.bf16.msra.mxu0 %v602
    %824 = vmatprep.subr.bf16.mxu0 %v601
    %825 = vmatpush1.bf16.msra.mxu0 %v600
    %826 = vmatprep.subr.bf16.mxu0 %v599
    %827 = vmatpush1.bf16.msra.mxu0 %v598
    %828 = vmatprep.subr.bf16.mxu0 %v597
    %829 = vmatpush1.bf16.msra.mxu0 %v596
    %830 = vmatprep.subr.bf16.mxu0 %v595
    %831 = vmatpush1.bf16.msra.mxu0 %v594
    %832 = vmatprep.subr.bf16.mxu0 %v625
    %833 = vmatpush2.bf16.msra.mxu0 %v624
    %834 = vmatprep.subr.bf16.mxu0 %v623
    %835 = vmatpush2.bf16.msra.mxu0 %v622
    %836 = vmatprep.subr.bf16.mxu0 %v621
    %837 = vmatpush2.bf16.msra.mxu0 %v620
    %838 = vmatprep.subr.bf16.mxu0 %v619
    %839 = vmatpush2.bf16.msra.mxu0 %v618
    %840 = vmatprep.subr.bf16.mxu0 %v617
    %841 = vmatpush2.bf16.msra.mxu0 %v616
    %842 = vmatprep.subr.bf16.mxu0 %v615
    %843 = vmatpush2.bf16.msra.mxu0 %v614
    %844 = vmatprep.subr.bf16.mxu0 %v613
    %845 = vmatpush2.bf16.msra.mxu0 %v612
    %846 = vmatprep.subr.bf16.mxu0 %v611
    %847 = vmatpush2.bf16.msra.mxu0 %v610
    %848 = vmatprep.mubr.bf16.mxu0 %v228
    %849 = vmatmul.mubr.bf16.gmra.mxu0 %v227
    %v850 = vpop.f32.mrf.mxu0
    %v851 = vadd.f32 %v808, %v850
    %v852 = vpop.f32.mrf.mxu0
    %v853 = vadd.f32 %v810, %v852
    %v854 = vpop.f32.mrf.mxu0
    %v855 = vadd.f32 %v812, %v854
    %v856 = vpop.f32.mrf.mxu0
    %v857 = vadd.f32 %v814, %v856
    %858 = vdwg.mxu0
    %859 = vmatprep.subr.bf16.mxu0 0
    %860 = vmatpush1.bf16.msra.mxu0 0
    %861 = vmatprep.subr.bf16.mxu0 0
    %862 = vmatpush1.bf16.msra.mxu0 0
    %863 = vmatprep.subr.bf16.mxu0 0
    %864 = vmatpush1.bf16.msra.mxu0 0
    %865 = vmatprep.subr.bf16.mxu0 0
    %866 = vmatpush1.bf16.msra.mxu0 0
    %867 = vmatprep.subr.bf16.mxu0 0
    %868 = vmatpush1.bf16.msra.mxu0 0
    %869 = vmatprep.subr.bf16.mxu0 0
    %870 = vmatpush1.bf16.msra.mxu0 0
    %871 = vmatprep.subr.bf16.mxu0 0
    %872 = vmatpush1.bf16.msra.mxu0 0
    %873 = vmatprep.subr.bf16.mxu0 %v627
    %874 = vmatpush1.bf16.msra.mxu0 %v626
    %875 = vmatprep.subr.bf16.mxu0 0
    %876 = vmatpush2.bf16.msra.mxu0 0
    %877 = vmatprep.subr.bf16.mxu0 0
    %878 = vmatpush2.bf16.msra.mxu0 0
    %879 = vmatprep.subr.bf16.mxu0 0
    %880 = vmatpush2.bf16.msra.mxu0 0
    %881 = vmatprep.subr.bf16.mxu0 0
    %882 = vmatpush2.bf16.msra.mxu0 0
    %883 = vmatprep.subr.bf16.mxu0 0
    %884 = vmatpush2.bf16.msra.mxu0 0
    %885 = vmatprep.subr.bf16.mxu0 0
    %886 = vmatpush2.bf16.msra.mxu0 0
    %887 = vmatprep.subr.bf16.mxu0 0
    %888 = vmatpush2.bf16.msra.mxu0 0
    %889 = vmatprep.subr.bf16.mxu0 0
    %890 = vmatpush2.bf16.msra.mxu0 0
    %891 = vmatprep.mubr.bf16.mxu0 0
    %892 = vmatmul.mubr.bf16.gmra.mxu0 %v728
    %v893 = vpop.f32.mrf.mxu0
    %v894 = vadd.f32 %v851, %v893
    %v895 = vpop.f32.mrf.mxu0
    %v896 = vadd.f32 %v853, %v895
    %v897 = vpop.f32.mrf.mxu0
    %v898 = vadd.f32 %v855, %v897
    %v899 = vpop.f32.mrf.mxu0
    %v900 = vadd.f32 %v857, %v899
    %901 = vdwg.mxu0
    %vm902 = vcmp.ge.f32.partialorder %v894, 0.0
    %vm903 = vcmp.ge.f32.partialorder %v896, 0.0
    %vm904 = vcmp.ge.f32.partialorder %v898, 0.0
    %vm905 = vcmp.ge.f32.partialorder %v900, 0.0
    %v906 = vmul.f32 %v894, 0.2
    %v907 = vmul.f32 %v896, 0.2
    %v908 = vmul.f32 %v898, 0.2
    %v909 = vmul.f32 %v900, 0.2
    %v910 = vsel %vm902, %v894, %v906
    %v911 = vsel %vm903, %v896, %v907
    %v912 = vsel %vm904, %v898, %v908
    %v913 = vsel %vm905, %v900, %v909
    %v914 = vpack.c.bf16 %v912, %v910
    %v915 = vpack.c.bf16 %v913, %v911
    %v916 = vld [vmem:[#allocation7] sm:$0xf]
    %v917 = vld [vmem:[#allocation7 + $0x4] sm:$0xf]
    %v918 = vld [vmem:[#allocation7 + $0x8] sm:$0xf]
    %v919 = vld [vmem:[#allocation7 + $0xc] sm:$0xf]
    %v920 = vld [vmem:[#allocation7 + $0x10] sm:$0xf]
    %v921 = vld [vmem:[#allocation7 + $0x14] sm:$0xf]
    %v922 = vld [vmem:[#allocation7 + $0x18] sm:$0xf]
    %v923 = vld [vmem:[#allocation7 + $0x1c] sm:$0xf]
    %v924 = vld [vmem:[#allocation7 + $0x20] sm:$0xf]
    %v925 = vld [vmem:[#allocation7 + $0x24] sm:$0xf]
    %v926 = vld [vmem:[#allocation7 + $0x28] sm:$0xf]
    %v927 = vld [vmem:[#allocation7 + $0x2c] sm:$0xf]
    %v928 = vld [vmem:[#allocation7 + $0x30] sm:$0xf]
    %v929 = vld [vmem:[#allocation7 + $0x34] sm:$0xf]
    %v930 = vld [vmem:[#allocation7 + $0x38] sm:$0xf]
    %v931 = vld [vmem:[#allocation7 + $0x3c] sm:$0xf]
    %v932 = vld [vmem:[#allocation7 + $0x40] sm:$0xf]
    %v933 = vld [vmem:[#allocation7 + $0x44] sm:$0xf]
    %v934 = vld [vmem:[#allocation7 + $0x48] sm:$0xf]
    %v935 = vld [vmem:[#allocation7 + $0x4c] sm:$0xf]
    %v936 = vld [vmem:[#allocation7 + $0x50] sm:$0xf]
    %v937 = vld [vmem:[#allocation7 + $0x54] sm:$0xf]
    %v938 = vld [vmem:[#allocation7 + $0x58] sm:$0xf]
    %v939 = vld [vmem:[#allocation7 + $0x5c] sm:$0xf]
    %v940 = vld [vmem:[#allocation7 + $0x60] sm:$0xf]
    %v941 = vld [vmem:[#allocation7 + $0x64] sm:$0xf]
    %v942 = vld [vmem:[#allocation7 + $0x68] sm:$0xf]
    %v943 = vld [vmem:[#allocation7 + $0x6c] sm:$0xf]
    %v944 = vld [vmem:[#allocation7 + $0x70] sm:$0xf]
    %v945 = vld [vmem:[#allocation7 + $0x74] sm:$0xf]
    %v946 = vld [vmem:[#allocation7 + $0x78] sm:$0xf]
    %v947 = vld [vmem:[#allocation7 + $0x7c] sm:$0xf]
    %v948 = vld [vmem:[%s4] sm:$0x1]
    %v950 = vlaneseq
    %v951 = vshrl.u32 %v950, 7
    %v952 = vsub.s32 0, %v951
    %v953 = vrot.slane %v948, %v952
    %v987 = vunpack.c.l.b16 %v916
    %v988 = vunpack.c.l.b16 %v917
    %v989 = vunpack.c.l.b16 %v918
    %v990 = vunpack.c.l.b16 %v919
    %v991 = vunpack.c.l.b16 %v920
    %v992 = vunpack.c.l.b16 %v921
    %v993 = vunpack.c.l.b16 %v922
    %v994 = vunpack.c.l.b16 %v923
    %v995 = vunpack.c.l.b16 %v924
    %v996 = vunpack.c.l.b16 %v925
    %v997 = vunpack.c.l.b16 %v926
    %v998 = vunpack.c.l.b16 %v927
    %v999 = vunpack.c.l.b16 %v928
    %v1000 = vunpack.c.l.b16 %v929
    %v1001 = vunpack.c.l.b16 %v930
    %v1002 = vunpack.c.l.b16 %v931
    %v1003 = vunpack.c.l.b16 %v932
    %v1004 = vunpack.c.l.b16 %v933
    %v1005 = vunpack.c.l.b16 %v934
    %v1006 = vunpack.c.l.b16 %v935
    %v1007 = vunpack.c.l.b16 %v936
    %v1008 = vunpack.c.l.b16 %v937
    %v1009 = vunpack.c.l.b16 %v938
    %v1010 = vunpack.c.l.b16 %v939
    %v1011 = vunpack.c.l.b16 %v940
    %v1012 = vunpack.c.l.b16 %v941
    %v1013 = vunpack.c.l.b16 %v942
    %v1014 = vunpack.c.l.b16 %v943
    %v1015 = vunpack.c.l.b16 %v944
    %v1016 = vunpack.c.l.b16 %v945
    %v1017 = vunpack.c.l.b16 %v946
    %v1018 = vunpack.c.l.b16 %v947
    %v1019 = vpack.c.b16 %v988, %v987
    %v1020 = vpack.c.b16 %v990, %v989
    %v1021 = vpack.c.b16 %v992, %v991
    %v1022 = vpack.c.b16 %v994, %v993
    %v1023 = vpack.c.b16 %v996, %v995
    %v1024 = vpack.c.b16 %v998, %v997
    %v1025 = vpack.c.b16 %v1000, %v999
    %v1026 = vpack.c.b16 %v1002, %v1001
    %v1027 = vpack.c.b16 %v1004, %v1003
    %v1028 = vpack.c.b16 %v1006, %v1005
    %v1029 = vpack.c.b16 %v1008, %v1007
    %v1030 = vpack.c.b16 %v1010, %v1009
    %v1031 = vpack.c.b16 %v1012, %v1011
    %v1032 = vpack.c.b16 %v1014, %v1013
    %v1033 = vpack.c.b16 %v1016, %v1015
    %v1034 = vpack.c.b16 %v1018, %v1017
    %1051 = vmatprep.subr.bf16.mxu0 0
    %1052 = vmatpush1.bf16.msra.mxu0 %v1026
    %1053 = vmatprep.subr.bf16.mxu0 0
    %1054 = vmatpush1.bf16.msra.mxu0 %v1025
    %1055 = vmatprep.subr.bf16.mxu0 0
    %1056 = vmatpush1.bf16.msra.mxu0 %v1024
    %1057 = vmatprep.subr.bf16.mxu0 0
    %1058 = vmatpush1.bf16.msra.mxu0 %v1023
    %1059 = vmatprep.subr.bf16.mxu0 0
    %1060 = vmatpush1.bf16.msra.mxu0 %v1022
    %1061 = vmatprep.subr.bf16.mxu0 0
    %1062 = vmatpush1.bf16.msra.mxu0 %v1021
    %1063 = vmatprep.subr.bf16.mxu0 0
    %1064 = vmatpush1.bf16.msra.mxu0 %v1020
    %1065 = vmatprep.subr.bf16.mxu0 0
    %1066 = vmatpush1.bf16.msra.mxu0 %v1019
    %1067 = vmatprep.subr.bf16.mxu0 0
    %1068 = vmatpush2.bf16.msra.mxu0 %v1034
    %1069 = vmatprep.subr.bf16.mxu0 0
    %1070 = vmatpush2.bf16.msra.mxu0 %v1033
    %1071 = vmatprep.subr.bf16.mxu0 0
    %1072 = vmatpush2.bf16.msra.mxu0 %v1032
    %1073 = vmatprep.subr.bf16.mxu0 0
    %1074 = vmatpush2.bf16.msra.mxu0 %v1031
    %1075 = vmatprep.subr.bf16.mxu0 0
    %1076 = vmatpush2.bf16.msra.mxu0 %v1030
    %1077 = vmatprep.subr.bf16.mxu0 0
    %1078 = vmatpush2.bf16.msra.mxu0 %v1029
    %1079 = vmatprep.subr.bf16.mxu0 0
    %1080 = vmatpush2.bf16.msra.mxu0 %v1028
    %1081 = vmatprep.subr.bf16.mxu0 0
    %1082 = vmatpush2.bf16.msra.mxu0 %v1027
    %1083 = vmatprep.mubr.bf16.mxu0 %v915
    %1084 = vmatmul.mubr.bf16.gmra.mxu0 %v914
    %v1085 = vpop.f32.mrf.mxu0
    %v1086 = vadd.f32 %v953, %v1085
    %v1087 = vpop.f32.mrf.mxu0
    %v1088 = vpop.f32.mrf.mxu0
    %v1089 = vadd.f32 %v953, %v1088
    %v1090 = vpop.f32.mrf.mxu0
    %1091 = vdwg.mxu0
    %vm1092 = vcmp.ge.f32.partialorder %v1086, 0.0
    %vm1093 = vcmp.ge.f32.partialorder %v1089, 0.0
    %v1094 = vmul.f32 %v1086, 0.2
    %v1095 = vmul.f32 %v1089, 0.2
    %v1096 = vsel %vm1092, %v1086, %v1094
    %v1097 = vsel %vm1093, %v1089, %v1095
    %v1098 = vpack.c.bf16 %v1097, %v1096
    %v1099 = vld [vmem:[#allocation8] sm:$0xf]
    %v1100 = vld [vmem:[#allocation8 + $0x4] sm:$0xf]
    %v1101 = vld [vmem:[#allocation8 + $0x8] sm:$0xf]
    %v1102 = vld [vmem:[#allocation8 + $0xc] sm:$0xf]
    %v1103 = vld [vmem:[#allocation8 + $0x10] sm:$0xf]
    %v1104 = vld [vmem:[#allocation8 + $0x14] sm:$0xf]
    %v1105 = vld [vmem:[#allocation8 + $0x18] sm:$0xf]
    %v1106 = vld [vmem:[#allocation8 + $0x1c] sm:$0xf]
    %v1107 = vld [vmem:[#allocation8 + $0x20] sm:$0xf]
    %v1108 = vld [vmem:[#allocation8 + $0x24] sm:$0xf]
    %v1109 = vld [vmem:[#allocation8 + $0x28] sm:$0xf]
    %v1110 = vld [vmem:[#allocation8 + $0x2c] sm:$0xf]
    %v1111 = vld [vmem:[#allocation8 + $0x30] sm:$0xf]
    %v1112 = vld [vmem:[#allocation8 + $0x34] sm:$0xf]
    %v1113 = vld [vmem:[#allocation8 + $0x38] sm:$0xf]
    %v1114 = vld [vmem:[#allocation8 + $0x3c] sm:$0xf]
    %v1115 = vld [vmem:[%s6] sm:$0x1]
    %v1117 = vlaneseq
    %v1118 = vshrl.u32 %v1117, 7
    %v1119 = vsub.s32 0, %v1118
    %v1120 = vrot.slane %v1115, %v1119
    %v1138 = vunpack.c.l.b16 %v1099
    %v1139 = vunpack.c.l.b16 %v1100
    %v1140 = vunpack.c.l.b16 %v1101
    %v1141 = vunpack.c.l.b16 %v1102
    %v1142 = vunpack.c.l.b16 %v1103
    %v1143 = vunpack.c.l.b16 %v1104
    %v1144 = vunpack.c.l.b16 %v1105
    %v1145 = vunpack.c.l.b16 %v1106
    %v1146 = vunpack.c.l.b16 %v1107
    %v1147 = vunpack.c.l.b16 %v1108
    %v1148 = vunpack.c.l.b16 %v1109
    %v1149 = vunpack.c.l.b16 %v1110
    %v1150 = vunpack.c.l.b16 %v1111
    %v1151 = vunpack.c.l.b16 %v1112
    %v1152 = vunpack.c.l.b16 %v1113
    %v1153 = vunpack.c.l.b16 %v1114
    %v1154 = vpack.c.b16 %v1139, %v1138
    %v1155 = vpack.c.b16 %v1141, %v1140
    %v1156 = vpack.c.b16 %v1143, %v1142
    %v1157 = vpack.c.b16 %v1145, %v1144
    %v1158 = vpack.c.b16 %v1147, %v1146
    %v1159 = vpack.c.b16 %v1149, %v1148
    %v1160 = vpack.c.b16 %v1151, %v1150
    %v1161 = vpack.c.b16 %v1153, %v1152
    %1170 = vmatprep.subr.bf16.mxu0 0
    %1171 = vmatpush1.bf16.msra.mxu0 %v1161
    %1172 = vmatprep.subr.bf16.mxu0 0
    %1173 = vmatpush1.bf16.msra.mxu0 %v1160
    %1174 = vmatprep.subr.bf16.mxu0 0
    %1175 = vmatpush1.bf16.msra.mxu0 %v1159
    %1176 = vmatprep.subr.bf16.mxu0 0
    %1177 = vmatpush1.bf16.msra.mxu0 %v1158
    %1178 = vmatprep.subr.bf16.mxu0 0
    %1179 = vmatpush1.bf16.msra.mxu0 %v1157
    %1180 = vmatprep.subr.bf16.mxu0 0
    %1181 = vmatpush1.bf16.msra.mxu0 %v1156
    %1182 = vmatprep.subr.bf16.mxu0 0
    %1183 = vmatpush1.bf16.msra.mxu0 %v1155
    %1184 = vmatprep.subr.bf16.mxu0 0
    %1185 = vmatpush1.bf16.msra.mxu0 %v1154
    %1186 = vmatprep.subr.bf16.mxu0 0
    %1187 = vmatpush2.bf16.msra.mxu0 0
    %1188 = vmatprep.subr.bf16.mxu0 0
    %1189 = vmatpush2.bf16.msra.mxu0 0
    %1190 = vmatprep.subr.bf16.mxu0 0
    %1191 = vmatpush2.bf16.msra.mxu0 0
    %1192 = vmatprep.subr.bf16.mxu0 0
    %1193 = vmatpush2.bf16.msra.mxu0 0
    %1194 = vmatprep.subr.bf16.mxu0 0
    %1195 = vmatpush2.bf16.msra.mxu0 0
    %1196 = vmatprep.subr.bf16.mxu0 0
    %1197 = vmatpush2.bf16.msra.mxu0 0
    %1198 = vmatprep.subr.bf16.mxu0 0
    %1199 = vmatpush2.bf16.msra.mxu0 0
    %1200 = vmatprep.subr.bf16.mxu0 0
    %1201 = vmatpush2.bf16.msra.mxu0 0
    %1202 = vmatprep.mubr.bf16.mxu0 0
    %1203 = vmatmul.mubr.bf16.gmra.mxu0 %v1098
    %v1204 = vpop.f32.mrf.mxu0
    %v1205 = vadd.f32 %v1120, %v1204
    %v1206 = vpop.f32.mrf.mxu0
    %v1207 = vpop.f32.mrf.mxu0
    %v1208 = vadd.f32 %v1120, %v1207
    %v1209 = vpop.f32.mrf.mxu0
    %1210 = vdwg.mxu0
    %v1211 = vsub.f32 0.0, %v1205
    %v1212 = vsub.f32 0.0, %v1208
    %v1213 = vmul.f32 %v1211, 1.442695
    %v1214 = vpow.pop %v1213
    %v1215 = vmul.f32 %v1212, 1.442695
    %v1216 = vpow.pop %v1215
    %v1217 = vadd.f32 %v1214, 1.0
    %v1218 = vadd.f32 %v1216, 1.0
    %v1219 = vrcp.pop %v1217
    %v1220 = vmul.f32 1.0, %v1219
    %v1221 = vrcp.pop %v1218
    %v1222 = vmul.f32 1.0, %v1221
    %v1223 = vpack.c.bf16 %v1222, %v1220
    %v1225 = vunpack.c.l.b16 %v1223
    %v1226 = vunpack.c.h.b16 %v1223
    %v1227 = vpack.c.b16 %v1225, %v1225
    %v1228 = vpack.c.b16 %v1226, %v1226
    %1231 = vst [vmem:[#allocation10] sm:$0xf] %v1227
    %1232 = vst [vmem:[#allocation10 + $0x4] sm:$0xf] %v1228
    // Predicated region
    $region46: #{tpu_custom_call.1} parent=1 // pred_check
      _
    $region47: #{tpu_custom_call.1} parent=1 // pred_check_branch
      %1234 = sbr.rel (0) target = $region49
    $region48: #{tpu_custom_call.1} parent=1 // pred_region
      %s1236 = ssub.s32 128, 128
      %1237 = vsyncadd [#allocation4], %s1236
      %s1238 = sshll.u32 [#allocation10], 4
      %s1239 = int_to_ptr.vmem [resolvable:$true] %s1238
      %1244 = dma.vmem_to_hbm [thread:$0]  %s1239, 128, %s7, [#allocation4], 64, 64, 4
    $region49: #{tpu_custom_call.1} parent=1 // pred_fallthru
      _
    // Predicated region
    $region50: #{tpu_custom_call.1} parent=1 // pred_check
      _
    $region51: #{tpu_custom_call.1} parent=1 // pred_check_branch
      %1246 = sbr.rel (0) target = $region53
    $region52: #{tpu_custom_call.1} parent=1 // pred_region
      %1247 = dma.done [#allocation4], 128
    $region53: #{tpu_custom_call.1} parent=1 // pred_fallthru
      _
    %1248 = vsyncpa [#allocation3], 1
    %1249 = vsyncpa [#allocation6], 1
    %1250 = vsyncpa [#allocation9], 1
    %1251 = vsyncpa [#allocation4], 1

// kernel: tpu_custom_call.1
$region0: #{tpu_custom_call.1}
  #allocation0 [shape = 'u32[]', space=smem, size = 0x4, offset = 0x4, fixed_abs, tag = 'smem constant byte address 0x4 - core index']
  #allocation1 [shape = 'u32[144,128]{1,0:T(1,128)}', space=vmem, size = 0x12000, scoped, tag = 'internal scratch']
  %s0 = inlined_call_operand.hbm [shape: bf16[16,784], index: 0, kind: input, shape index: {}]
  %s1 = inlined_call_operand.hbm [shape: bf16[784,256], index: 1, kind: input, shape index: {}]
  %s2 = inlined_call_operand.vmem [shape: f32[1,256], index: 2, kind: input, shape index: {}]
  %s3 = inlined_call_operand.hbm [shape: bf16[256,128], index: 3, kind: input, shape index: {}]
  %s4 = inlined_call_operand.vmem [shape: f32[1,128], index: 4, kind: input, shape index: {}]
  %s5 = inlined_call_operand.hbm [shape: bf16[128,128], index: 5, kind: input, shape index: {}]
  %s6 = inlined_call_operand.vmem [shape: f32[1,128], index: 6, kind: input, shape index: {}]
  %s7 = inlined_call_operand.hbm [shape: bf16[16,128], index: 7, kind: output, shape index: {}]
  %s8 = sld [smem:[#allocation0]]
  $region54: #{tpu_custom_call.1} parent=0
    _
  %s10 = ssub.s32 1, %s8
  %s11 = scalar_select 0, %s10, %s8
  $region1: #{tpu_custom_call.1} parent=0
    #allocation2 [shape = 'u8[28672]{0}', space=vmem, size = 0x7000, scoped, tag = 'input window, operand 0, single buffered']
    #allocation3 [shape = 's32[1]{0}', space=sflag, size = 0x4, scoped, tag = 'scoped memory for tpu_custom_call.1']
    #allocation4 [shape = 's32[1]{0}', space=sflag, size = 0x4, scoped, tag = 'scoped memory for tpu_custom_call.1']
    #allocation5 [shape = 'u8[401408]{0}', space=vmem, size = 0x62000, scoped, tag = 'input window, operand 1, single buffered']
    #allocation6 [shape = 's32[1]{0}', space=sflag, size = 0x4, scoped, tag = 'scoped memory for tpu_custom_call.1']
    #allocation7 [shape = 'u8[65536]{0}', space=vmem, size = 0x10000, scoped, tag = 'input window, operand 3, single buffered']
    #allocation8 [shape = 'u8[32768]{0}', space=vmem, size = 0x8000, scoped, tag = 'input window, operand 5, single buffered']
    #allocation9 [shape = 's32[1]{0}', space=sflag, size = 0x4, scoped, tag = 'scoped memory for tpu_custom_call.1']
    #allocation10 [shape = 'u8[4096]{0}', space=vmem, size = 0x1000, scoped, tag = 'output window, operand 0, single buffered']
    %12 = vsyncpa [#allocation3], 0
    %13 = vsyncpa [#allocation6], 0
    %14 = vsyncpa [#allocation9], 0
    %15 = vsyncpa [#allocation4], 0
    // Predicated region
    $region2: #{tpu_custom_call.1} parent=1 // pred_check
      _
    $region3: #{tpu_custom_call.1} parent=1 // pred_check_branch
      %17 = sbr.rel (0) target = $region5
    $region4: #{tpu_custom_call.1} parent=1 // pred_region
      %s19 = ssub.s32 896, 896
      %20 = vsyncadd [#allocation3], %s19
      %s21 = sshll.u32 [#allocation2], 4
      %s22 = int_to_ptr.vmem [resolvable:$true] %s21
      %27 = dma.hbm_to_vmem [thread:$0]  %s0, 896, %s22, [#allocation3], 448, 448, 28
    $region5: #{tpu_custom_call.1} parent=1 // pred_fallthru
      _
    // Predicated region
    $region6: #{tpu_custom_call.1} parent=1 // pred_check
      _
    $region7: #{tpu_custom_call.1} parent=1 // pred_check_branch
      %29 = sbr.rel (0) target = $region9
    $region8: #{tpu_custom_call.1} parent=1 // pred_region
      %s31 = ssub.s32 12544, 12544
      %32 = vsyncadd [#allocation6], %s31
      %s33 = sshll.u32 [#allocation5], 4
      %s34 = int_to_ptr.vmem [resolvable:$true] %s33
      %39 = dma.hbm_to_vmem [thread:$0]  %s1, 12544, %s34, [#allocation6], 128, 128, 8
    $region9: #{tpu_custom_call.1} parent=1 // pred_fallthru
      _
    // Predicated region
    $region10: #{tpu_custom_call.1} parent=1 // pred_check
      _
    $region11: #{tpu_custom_call.1} parent=1 // pred_check_branch
      %41 = sbr.rel (0) target = $region13
    $region12: #{tpu_custom_call.1} parent=1 // pred_region
      _
    $region13: #{tpu_custom_call.1} parent=1 // pred_fallthru
      _
    // Predicated region
    $region14: #{tpu_custom_call.1} parent=1 // pred_check
      _
    $region15: #{tpu_custom_call.1} parent=1 // pred_check_branch
      %43 = sbr.rel (0) target = $region17
    $region16: #{tpu_custom_call.1} parent=1 // pred_region
      %s45 = ssub.s32 2048, 2048
      %46 = vsyncadd [#allocation6], %s45
      %s47 = sshll.u32 [#allocation7], 4
      %s48 = int_to_ptr.vmem [resolvable:$true] %s47
      %53 = dma.hbm_to_vmem [thread:$0]  %s3, 2048, %s48, [#allocation6], 64, 64, 4
    $region17: #{tpu_custom_call.1} parent=1 // pred_fallthru
      _
    // Predicated region
    $region18: #{tpu_custom_call.1} parent=1 // pred_check
      _
    $region19: #{tpu_custom_call.1} parent=1 // pred_check_branch
      %55 = sbr.rel (0) target = $region21
    $region20: #{tpu_custom_call.1} parent=1 // pred_region
      _
    $region21: #{tpu_custom_call.1} parent=1 // pred_fallthru
      _
    // Predicated region
    $region22: #{tpu_custom_call.1} parent=1 // pred_check
      _
    $region23: #{tpu_custom_call.1} parent=1 // pred_check_branch
      %57 = sbr.rel (0) target = $region25
    $region24: #{tpu_custom_call.1} parent=1 // pred_region
      %s59 = ssub.s32 1024, 1024
      %60 = vsyncadd [#allocation9], %s59
      %s61 = sshll.u32 [#allocation8], 4
      %s62 = int_to_ptr.vmem [resolvable:$true] %s61
      %67 = dma.hbm_to_vmem [thread:$0]  %s5, 1024, %s62, [#allocation9], 64, 64, 4
    $region25: #{tpu_custom_call.1} parent=1 // pred_fallthru
      _
    // Predicated region
    $region26: #{tpu_custom_call.1} parent=1 // pred_check
      _
    $region27: #{tpu_custom_call.1} parent=1 // pred_check_branch
      %69 = sbr.rel (0) target = $region29
    $region28: #{tpu_custom_call.1} parent=1 // pred_region
      _
    $region29: #{tpu_custom_call.1} parent=1 // pred_fallthru
      _
    // Predicated region
    $region30: #{tpu_custom_call.1} parent=1 // pred_check
      _
    $region31: #{tpu_custom_call.1} parent=1 // pred_check_branch
      %71 = sbr.rel (0) target = $region33
    $region32: #{tpu_custom_call.1} parent=1 // pred_region
      %72 = dma.done [#allocation3], 896
    $region33: #{tpu_custom_call.1} parent=1 // pred_fallthru
      _
    // Predicated region
    $region34: #{tpu_custom_call.1} parent=1 // pred_check
      _
    $region35: #{tpu_custom_call.1} parent=1 // pred_check_branch
      %74 = sbr.rel (0) target = $region37
    $region36: #{tpu_custom_call.1} parent=1 // pred_region
      %75 = dma.done [#allocation6], 12544
    $region37: #{tpu_custom_call.1} parent=1 // pred_fallthru
      _
    // Predicated region
    $region38: #{tpu_custom_call.1} parent=1 // pred_check
      _
    $region39: #{tpu_custom_call.1} parent=1 // pred_check_branch
      %77 = sbr.rel (0) target = $region41
    $region40: #{tpu_custom_call.1} parent=1 // pred_region
      %78 = dma.done [#allocation6], 2048
    $region41: #{tpu_custom_call.1} parent=1 // pred_fallthru
      _
    // Predicated region
    $region42: #{tpu_custom_call.1} parent=1 // pred_check
      _
    $region43: #{tpu_custom_call.1} parent=1 // pred_check_branch
      %80 = sbr.rel (0) target = $region45
    $region44: #{tpu_custom_call.1} parent=1 // pred_region
      %81 = dma.done [#allocation9], 1024
    $region45: #{tpu_custom_call.1} parent=1 // pred_fallthru
      _
    %v83 = vld [vmem:[#allocation2] sm:$0xff]
    %v84 = vld [vmem:[#allocation2 + $0x8] sm:$0xff]
    %v85 = vld [vmem:[#allocation2 + $0x10] sm:$0xff]
    %v86 = vld [vmem:[#allocation2 + $0x18] sm:$0xf]
    %v87 = vld [vmem:[#allocation2 + $0x1c] sm:$0xff]
    %v88 = vld [vmem:[#allocation2 + $0x24] sm:$0xff]
    %v89 = vld [vmem:[#allocation2 + $0x2c] sm:$0xff]
    %v90 = vld [vmem:[#allocation2 + $0x34] sm:$0xf]
    %v91 = vld [vmem:[#allocation5] sm:$0xff]
    %v92 = vld [vmem:[#allocation5 + $0x8] sm:$0xff]
    %v93 = vld [vmem:[#allocation5 + $0x10] sm:$0xff]
    %v94 = vld [vmem:[#allocation5 + $0x18] sm:$0xff]
    %v95 = vld [vmem:[#allocation5 + $0x20] sm:$0xff]
    %v96 = vld [vmem:[#allocation5 + $0x28] sm:$0xff]
    %v97 = vld [vmem:[#allocation5 + $0x30] sm:$0xff]
    %v98 = vld [vmem:[#allocation5 + $0x38] sm:$0xff]
    %v99 = vld [vmem:[#allocation5 + $0x40] sm:$0xff]
    %v100 = vld [vmem:[#allocation5 + $0x48] sm:$0xff]
    %v101 = vld [vmem:[#allocation5 + $0x50] sm:$0xff]
    %v102 = vld [vmem:[#allocation5 + $0x58] sm:$0xff]
    %v103 = vld [vmem:[#allocation5 + $0x60] sm:$0xff]
    %v104 = vld [vmem:[#allocation5 + $0x68] sm:$0xff]
    %v105 = vld [vmem:[#allocation5 + $0x70] sm:$0xff]
    %v106 = vld [vmem:[#allocation5 + $0x78] sm:$0xff]
    %v107 = vld [vmem:[#allocation5 + $0x80] sm:$0xff]
    %v108 = vld [vmem:[#allocation5 + $0x88] sm:$0xff]
    %v109 = vld [vmem:[#allocation5 + $0x90] sm:$0xff]
    %v110 = vld [vmem:[#allocation5 + $0x98] sm:$0xff]
    %v111 = vld [vmem:[#allocation5 + $0xa0] sm:$0xff]
    %v112 = vld [vmem:[#allocation5 + $0xa8] sm:$0xff]
    %v113 = vld [vmem:[#allocation5 + $0xb0] sm:$0xff]
    %v114 = vld [vmem:[#allocation5 + $0xb8] sm:$0xff]
    %v115 = vld [vmem:[#allocation5 + $0xc0] sm:$0xff]
    %v116 = vld [vmem:[#allocation5 + $0xc8] sm:$0xff]
    %v117 = vld [vmem:[#allocation5 + $0xd0] sm:$0xff]
    %v118 = vld [vmem:[#allocation5 + $0xd8] sm:$0xff]
    %v119 = vld [vmem:[#allocation5 + $0xe0] sm:$0xff]
    %v120 = vld [vmem:[#allocation5 + $0xe8] sm:$0xff]
    %v121 = vld [vmem:[#allocation5 + $0xf0] sm:$0xff]
    %v122 = vld [vmem:[#allocation5 + $0xf8] sm:$0xff]
    %v123 = vld [vmem:[#allocation5 + $0x100] sm:$0xff]
    %v124 = vld [vmem:[#allocation5 + $0x108] sm:$0xff]
    %v125 = vld [vmem:[#allocation5 + $0x110] sm:$0xff]
    %v126 = vld [vmem:[#allocation5 + $0x118] sm:$0xff]
    %v127 = vld [vmem:[#allocation5 + $0x120] sm:$0xff]
    %v128 = vld [vmem:[#allocation5 + $0x128] sm:$0xff]
    %v129 = vld [vmem:[#allocation5 + $0x130] sm:$0xff]
    %v130 = vld [vmem:[#allocation5 + $0x138] sm:$0xff]
    %v131 = vld [vmem:[#allocation5 + $0x140] sm:$0xff]
    %v132 = vld [vmem:[#allocation5 + $0x148] sm:$0xff]
    %v133 = vld [vmem:[#allocation5 + $0x150] sm:$0xff]
    %v134 = vld [vmem:[#allocation5 + $0x158] sm:$0xff]
    %v135 = vld [vmem:[#allocation5 + $0x160] sm:$0xff]
    %v136 = vld [vmem:[#allocation5 + $0x168] sm:$0xff]
    %v137 = vld [vmem:[#allocation5 + $0x170] sm:$0xff]
    %v138 = vld [vmem:[#allocation5 + $0x178] sm:$0xff]
    %v139 = vld [vmem:[#allocation5 + $0x180] sm:$0xff]
    %v140 = vld [vmem:[#allocation5 + $0x188] sm:$0xff]
    %v141 = vld [vmem:[#allocation5 + $0x190] sm:$0xff]
    %v142 = vld [vmem:[#allocation5 + $0x198] sm:$0xff]
    %v143 = vld [vmem:[#allocation5 + $0x1a0] sm:$0xff]
    %v144 = vld [vmem:[#allocation5 + $0x1a8] sm:$0xff]
    %v145 = vld [vmem:[#allocation5 + $0x1b0] sm:$0xff]
    %v146 = vld [vmem:[#allocation5 + $0x1b8] sm:$0xff]
    %v147 = vld [vmem:[#allocation5 + $0x1c0] sm:$0xff]
    %v148 = vld [vmem:[#allocation5 + $0x1c8] sm:$0xff]
    %v149 = vld [vmem:[#allocation5 + $0x1d0] sm:$0xff]
    %v150 = vld [vmem:[#allocation5 + $0x1d8] sm:$0xff]
    %v151 = vld [vmem:[#allocation5 + $0x1e0] sm:$0xff]
    %v152 = vld [vmem:[#allocation5 + $0x1e8] sm:$0xff]
    %v153 = vld [vmem:[#allocation5 + $0x1f0] sm:$0xff]
    %v154 = vld [vmem:[#allocation5 + $0x1f8] sm:$0xff]
    %v155 = vld [vmem:[#allocation5 + $0x200] sm:$0xff]
    %v156 = vld [vmem:[#allocation5 + $0x208] sm:$0xff]
    %v157 = vld [vmem:[#allocation5 + $0x210] sm:$0xff]
    %v158 = vld [vmem:[#allocation5 + $0x218] sm:$0xff]
    %v159 = vld [vmem:[#allocation5 + $0x220] sm:$0xff]
    %v160 = vld [vmem:[#allocation5 + $0x228] sm:$0xff]
    %v161 = vld [vmem:[#allocation5 + $0x230] sm:$0xff]
    %v162 = vld [vmem:[#allocation5 + $0x238] sm:$0xff]
    %v163 = vld [vmem:[#allocation5 + $0x240] sm:$0xff]
    %v164 = vld [vmem:[#allocation5 + $0x248] sm:$0xff]
    %v165 = vld [vmem:[#allocation5 + $0x250] sm:$0xff]
    %v166 = vld [vmem:[#allocation5 + $0x258] sm:$0xff]
    %v167 = vld [vmem:[#allocation5 + $0x260] sm:$0xff]
    %v168 = vld [vmem:[#allocation5 + $0x268] sm:$0xff]
    %v169 = vld [vmem:[#allocation5 + $0x270] sm:$0xff]
    %v170 = vld [vmem:[#allocation5 + $0x278] sm:$0xff]
    %v171 = vld [vmem:[#allocation5 + $0x280] sm:$0xff]
    %v172 = vld [vmem:[#allocation5 + $0x288] sm:$0xff]
    %v173 = vld [vmem:[#allocation5 + $0x290] sm:$0xff]
    %v174 = vld [vmem:[#allocation5 + $0x298] sm:$0xff]
    %v175 = vld [vmem:[#allocation5 + $0x2a0] sm:$0xff]
    %v176 = vld [vmem:[#allocation5 + $0x2a8] sm:$0xff]
    %v177 = vld [vmem:[#allocation5 + $0x2b0] sm:$0xff]
    %v178 = vld [vmem:[#allocation5 + $0x2b8] sm:$0xff]
    %v179 = vld [vmem:[#allocation5 + $0x2c0] sm:$0xff]
    %v180 = vld [vmem:[#allocation5 + $0x2c8] sm:$0xff]
    %v181 = vld [vmem:[#allocation5 + $0x2d0] sm:$0xff]
    %v182 = vld [vmem:[#allocation5 + $0x2d8] sm:$0xff]
    %v183 = vld [vmem:[#allocation5 + $0x2e0] sm:$0xff]
    %v184 = vld [vmem:[#allocation5 + $0x2e8] sm:$0xff]
    %v185 = vld [vmem:[#allocation5 + $0x2f0] sm:$0xff]
    %v186 = vld [vmem:[#allocation5 + $0x2f8] sm:$0xff]
    %v187 = vld [vmem:[#allocation5 + $0x300] sm:$0xff]
    %v188 = vld [vmem:[#allocation5 + $0x308] sm:$0xff]
    %v189 = vld [vmem:[%s2] sm:$0x3]
    %v191 = vlaneseq
    %v192 = vshrl.u32 %v191, 7
    %v193 = vsub.s32 0, %v192
    %v194 = vrot.slane %v189, %v193
    %v195 = vlaneseq
    %v196 = vshrl.u32 %v195, 7
    %v197 = vsub.s32 1, %v196
    %v198 = vrot.slane %v189, %v197
    %v209 = vunpack.c.l.b16 %v83
    %v210 = vunpack.c.h.b16 %v83
    %v211 = vunpack.c.l.b16 %v84
    %v212 = vunpack.c.h.b16 %v84
    %v213 = vunpack.c.l.b16 %v85
    %v214 = vunpack.c.h.b16 %v85
    %v215 = vunpack.c.l.b16 %v86
    %v216 = vunpack.c.l.b16 %v87
    %v217 = vunpack.c.h.b16 %v87
    %v218 = vunpack.c.l.b16 %v88
    %v219 = vunpack.c.h.b16 %v88
    %v220 = vunpack.c.l.b16 %v89
    %v221 = vunpack.c.h.b16 %v89
    %v222 = vunpack.c.l.b16 %v90
    %v223 = vpack.c.b16 %v216, %v209
    %v224 = vpack.c.b16 %v217, %v210
    %v225 = vpack.c.b16 %v218, %v211
    %v226 = vpack.c.b16 %v219, %v212
    %v227 = vpack.c.b16 %v220, %v213
    %v228 = vpack.c.b16 %v221, %v214
    %v229 = vpack.c.b16 %v222, %v215
    %v334 = vunpack.c.l.b16 %v91
    %v335 = vunpack.c.h.b16 %v91
    %v336 = vunpack.c.l.b16 %v92
    %v337 = vunpack.c.h.b16 %v92
    %v338 = vunpack.c.l.b16 %v93
    %v339 = vunpack.c.h.b16 %v93
    %v340 = vunpack.c.l.b16 %v94
    %v341 = vunpack.c.h.b16 %v94
    %v342 = vunpack.c.l.b16 %v95
    %v343 = vunpack.c.h.b16 %v95
    %v344 = vunpack.c.l.b16 %v96
    %v345 = vunpack.c.h.b16 %v96
    %v346 = vunpack.c.l.b16 %v97
    %v347 = vunpack.c.h.b16 %v97
    %v348 = vunpack.c.l.b16 %v98
    %v349 = vunpack.c.h.b16 %v98
    %v350 = vunpack.c.l.b16 %v99
    %v351 = vunpack.c.h.b16 %v99
    %v352 = vunpack.c.l.b16 %v100
    %v353 = vunpack.c.h.b16 %v100
    %v354 = vunpack.c.l.b16 %v101
    %v355 = vunpack.c.h.b16 %v101
    %v356 = vunpack.c.l.b16 %v102
    %v357 = vunpack.c.h.b16 %v102
    %v358 = vunpack.c.l.b16 %v103
    %v359 = vunpack.c.h.b16 %v103
    %v360 = vunpack.c.l.b16 %v104
    %v361 = vunpack.c.h.b16 %v104
    %v362 = vunpack.c.l.b16 %v105
    %v363 = vunpack.c.h.b16 %v105
    %v364 = vunpack.c.l.b16 %v106
    %v365 = vunpack.c.h.b16 %v106
    %v366 = vunpack.c.l.b16 %v107
    %v367 = vunpack.c.h.b16 %v107
    %v368 = vunpack.c.l.b16 %v108
    %v369 = vunpack.c.h.b16 %v108
    %v370 = vunpack.c.l.b16 %v109
    %v371 = vunpack.c.h.b16 %v109
    %v372 = vunpack.c.l.b16 %v110
    %v373 = vunpack.c.h.b16 %v110
    %v374 = vunpack.c.l.b16 %v111
    %v375 = vunpack.c.h.b16 %v111
    %v376 = vunpack.c.l.b16 %v112
    %v377 = vunpack.c.h.b16 %v112
    %v378 = vunpack.c.l.b16 %v113
    %v379 = vunpack.c.h.b16 %v113
    %v380 = vunpack.c.l.b16 %v114
    %v381 = vunpack.c.h.b16 %v114
    %v382 = vunpack.c.l.b16 %v115
    %v383 = vunpack.c.h.b16 %v115
    %v384 = vunpack.c.l.b16 %v116
    %v385 = vunpack.c.h.b16 %v116
    %v386 = vunpack.c.l.b16 %v117
    %v387 = vunpack.c.h.b16 %v117
    %v388 = vunpack.c.l.b16 %v118
    %v389 = vunpack.c.h.b16 %v118
    %v390 = vunpack.c.l.b16 %v119
    %v391 = vunpack.c.h.b16 %v119
    %v392 = vunpack.c.l.b16 %v120
    %v393 = vunpack.c.h.b16 %v120
    %v394 = vunpack.c.l.b16 %v121
    %v395 = vunpack.c.h.b16 %v121
    %v396 = vunpack.c.l.b16 %v122
    %v397 = vunpack.c.h.b16 %v122
    %v398 = vunpack.c.l.b16 %v123
    %v399 = vunpack.c.h.b16 %v123
    %v400 = vunpack.c.l.b16 %v124
    %v401 = vunpack.c.h.b16 %v124
    %v402 = vunpack.c.l.b16 %v125
    %v403 = vunpack.c.h.b16 %v125
    %v404 = vunpack.c.l.b16 %v126
    %v405 = vunpack.c.h.b16 %v126
    %v406 = vunpack.c.l.b16 %v127
    %v407 = vunpack.c.h.b16 %v127
    %v408 = vunpack.c.l.b16 %v128
    %v409 = vunpack.c.h.b16 %v128
    %v410 = vunpack.c.l.b16 %v129
    %v411 = vunpack.c.h.b16 %v129
    %v412 = vunpack.c.l.b16 %v130
    %v413 = vunpack.c.h.b16 %v130
    %v414 = vunpack.c.l.b16 %v131
    %v415 = vunpack.c.h.b16 %v131
    %v416 = vunpack.c.l.b16 %v132
    %v417 = vunpack.c.h.b16 %v132
    %v418 = vunpack.c.l.b16 %v133
    %v419 = vunpack.c.h.b16 %v133
    %v420 = vunpack.c.l.b16 %v134
    %v421 = vunpack.c.h.b16 %v134
    %v422 = vunpack.c.l.b16 %v135
    %v423 = vunpack.c.h.b16 %v135
    %v424 = vunpack.c.l.b16 %v136
    %v425 = vunpack.c.h.b16 %v136
    %v426 = vunpack.c.l.b16 %v137
    %v427 = vunpack.c.h.b16 %v137
    %v428 = vunpack.c.l.b16 %v138
    %v429 = vunpack.c.h.b16 %v138
    %v430 = vunpack.c.l.b16 %v139
    %v431 = vunpack.c.h.b16 %v139
    %v432 = vunpack.c.l.b16 %v140
    %v433 = vunpack.c.h.b16 %v140
    %v434 = vunpack.c.l.b16 %v141
    %v435 = vunpack.c.h.b16 %v141
    %v436 = vunpack.c.l.b16 %v142
    %v437 = vunpack.c.h.b16 %v142
    %v438 = vunpack.c.l.b16 %v143
    %v439 = vunpack.c.h.b16 %v143
    %v440 = vunpack.c.l.b16 %v144
    %v441 = vunpack.c.h.b16 %v144
    %v442 = vunpack.c.l.b16 %v145
    %v443 = vunpack.c.h.b16 %v145
    %v444 = vunpack.c.l.b16 %v146
    %v445 = vunpack.c.h.b16 %v146
    %v446 = vunpack.c.l.b16 %v147
    %v447 = vunpack.c.h.b16 %v147
    %v448 = vunpack.c.l.b16 %v148
    %v449 = vunpack.c.h.b16 %v148
    %v450 = vunpack.c.l.b16 %v149
    %v451 = vunpack.c.h.b16 %v149
    %v452 = vunpack.c.l.b16 %v150
    %v453 = vunpack.c.h.b16 %v150
    %v454 = vunpack.c.l.b16 %v151
    %v455 = vunpack.c.h.b16 %v151
    %v456 = vunpack.c.l.b16 %v152
    %v457 = vunpack.c.h.b16 %v152
    %v458 = vunpack.c.l.b16 %v153
    %v459 = vunpack.c.h.b16 %v153
    %v460 = vunpack.c.l.b16 %v154
    %v461 = vunpack.c.h.b16 %v154
    %v462 = vunpack.c.l.b16 %v155
    %v463 = vunpack.c.h.b16 %v155
    %v464 = vunpack.c.l.b16 %v156
    %v465 = vunpack.c.h.b16 %v156
    %v466 = vunpack.c.l.b16 %v157
    %v467 = vunpack.c.h.b16 %v157
    %v468 = vunpack.c.l.b16 %v158
    %v469 = vunpack.c.h.b16 %v158
    %v470 = vunpack.c.l.b16 %v159
    %v471 = vunpack.c.h.b16 %v159
    %v472 = vunpack.c.l.b16 %v160
    %v473 = vunpack.c.h.b16 %v160
    %v474 = vunpack.c.l.b16 %v161
    %v475 = vunpack.c.h.b16 %v161
    %v476 = vunpack.c.l.b16 %v162
    %v477 = vunpack.c.h.b16 %v162
    %v478 = vunpack.c.l.b16 %v163
    %v479 = vunpack.c.h.b16 %v163
    %v480 = vunpack.c.l.b16 %v164
    %v481 = vunpack.c.h.b16 %v164
    %v482 = vunpack.c.l.b16 %v165
    %v483 = vunpack.c.h.b16 %v165
    %v484 = vunpack.c.l.b16 %v166
    %v485 = vunpack.c.h.b16 %v166
    %v486 = vunpack.c.l.b16 %v167
    %v487 = vunpack.c.h.b16 %v167
    %v488 = vunpack.c.l.b16 %v168
    %v489 = vunpack.c.h.b16 %v168
    %v490 = vunpack.c.l.b16 %v169
    %v491 = vunpack.c.h.b16 %v169
    %v492 = vunpack.c.l.b16 %v170
    %v493 = vunpack.c.h.b16 %v170
    %v494 = vunpack.c.l.b16 %v171
    %v495 = vunpack.c.h.b16 %v171
    %v496 = vunpack.c.l.b16 %v172
    %v497 = vunpack.c.h.b16 %v172
    %v498 = vunpack.c.l.b16 %v173
    %v499 = vunpack.c.h.b16 %v173
    %v500 = vunpack.c.l.b16 %v174
    %v501 = vunpack.c.h.b16 %v174
    %v502 = vunpack.c.l.b16 %v175
    %v503 = vunpack.c.h.b16 %v175
    %v504 = vunpack.c.l.b16 %v176
    %v505 = vunpack.c.h.b16 %v176
    %v506 = vunpack.c.l.b16 %v177
    %v507 = vunpack.c.h.b16 %v177
    %v508 = vunpack.c.l.b16 %v178
    %v509 = vunpack.c.h.b16 %v178
    %v510 = vunpack.c.l.b16 %v179
    %v511 = vunpack.c.h.b16 %v179
    %v512 = vunpack.c.l.b16 %v180
    %v513 = vunpack.c.h.b16 %v180
    %v514 = vunpack.c.l.b16 %v181
    %v515 = vunpack.c.h.b16 %v181
    %v516 = vunpack.c.l.b16 %v182
    %v517 = vunpack.c.h.b16 %v182
    %v518 = vunpack.c.l.b16 %v183
    %v519 = vunpack.c.h.b16 %v183
    %v520 = vunpack.c.l.b16 %v184
    %v521 = vunpack.c.h.b16 %v184
    %v522 = vunpack.c.l.b16 %v185
    %v523 = vunpack.c.h.b16 %v185
    %v524 = vunpack.c.l.b16 %v186
    %v525 = vunpack.c.h.b16 %v186
    %v526 = vunpack.c.l.b16 %v187
    %v527 = vunpack.c.h.b16 %v187
    %v528 = vunpack.c.l.b16 %v188
    %v529 = vunpack.c.h.b16 %v188
    %v530 = vpack.c.b16 %v336, %v334
    %v531 = vpack.c.b16 %v337, %v335
    %v532 = vpack.c.b16 %v340, %v338
    %v533 = vpack.c.b16 %v341, %v339
    %v534 = vpack.c.b16 %v344, %v342
    %v535 = vpack.c.b16 %v345, %v343
    %v536 = vpack.c.b16 %v348, %v346
    %v537 = vpack.c.b16 %v349, %v347
    %v538 = vpack.c.b16 %v352, %v350
    %v539 = vpack.c.b16 %v353, %v351
    %v540 = vpack.c.b16 %v356, %v354
    %v541 = vpack.c.b16 %v357, %v355
    %v542 = vpack.c.b16 %v360, %v358
    %v543 = vpack.c.b16 %v361, %v359
    %v544 = vpack.c.b16 %v364, %v362
    %v545 = vpack.c.b16 %v365, %v363
    %v546 = vpack.c.b16 %v368, %v366
    %v547 = vpack.c.b16 %v369, %v367
    %v548 = vpack.c.b16 %v372, %v370
    %v549 = vpack.c.b16 %v373, %v371
    %v550 = vpack.c.b16 %v376, %v374
    %v551 = vpack.c.b16 %v377, %v375
    %v552 = vpack.c.b16 %v380, %v378
    %v553 = vpack.c.b16 %v381, %v379
    %v554 = vpack.c.b16 %v384, %v382
    %v555 = vpack.c.b16 %v385, %v383
    %v556 = vpack.c.b16 %v388, %v386
    %v557 = vpack.c.b16 %v389, %v387
    %v558 = vpack.c.b16 %v392, %v390
    %v559 = vpack.c.b16 %v393, %v391
    %v560 = vpack.c.b16 %v396, %v394
    %v561 = vpack.c.b16 %v397, %v395
    %v562 = vpack.c.b16 %v400, %v398
    %v563 = vpack.c.b16 %v401, %v399
    %v564 = vpack.c.b16 %v404, %v402
    %v565 = vpack.c.b16 %v405, %v403
    %v566 = vpack.c.b16 %v408, %v406
    %v567 = vpack.c.b16 %v409, %v407
    %v568 = vpack.c.b16 %v412, %v410
    %v569 = vpack.c.b16 %v413, %v411
    %v570 = vpack.c.b16 %v416, %v414
    %v571 = vpack.c.b16 %v417, %v415
    %v572 = vpack.c.b16 %v420, %v418
    %v573 = vpack.c.b16 %v421, %v419
    %v574 = vpack.c.b16 %v424, %v422
    %v575 = vpack.c.b16 %v425, %v423
    %v576 = vpack.c.b16 %v428, %v426
    %v577 = vpack.c.b16 %v429, %v427
    %v578 = vpack.c.b16 %v432, %v430
    %v579 = vpack.c.b16 %v433, %v431
    %v580 = vpack.c.b16 %v436, %v434
    %v581 = vpack.c.b16 %v437, %v435
    %v582 = vpack.c.b16 %v440, %v438
    %v583 = vpack.c.b16 %v441, %v439
    %v584 = vpack.c.b16 %v444, %v442
    %v585 = vpack.c.b16 %v445, %v443
    %v586 = vpack.c.b16 %v448, %v446
    %v587 = vpack.c.b16 %v449, %v447
    %v588 = vpack.c.b16 %v452, %v450
    %v589 = vpack.c.b16 %v453, %v451
    %v590 = vpack.c.b16 %v456, %v454
    %v591 = vpack.c.b16 %v457, %v455
    %v592 = vpack.c.b16 %v460, %v458
    %v593 = vpack.c.b16 %v461, %v459
    %v594 = vpack.c.b16 %v464, %v462
    %v595 = vpack.c.b16 %v465, %v463
    %v596 = vpack.c.b16 %v468, %v466
    %v597 = vpack.c.b16 %v469, %v467
    %v598 = vpack.c.b16 %v472, %v470
    %v599 = vpack.c.b16 %v473, %v471
    %v600 = vpack.c.b16 %v476, %v474
    %v601 = vpack.c.b16 %v477, %v475
    %v602 = vpack.c.b16 %v480, %v478
    %v603 = vpack.c.b16 %v481, %v479
    %v604 = vpack.c.b16 %v484, %v482
    %v605 = vpack.c.b16 %v485, %v483
    %v606 = vpack.c.b16 %v488, %v486
    %v607 = vpack.c.b16 %v489, %v487
    %v608 = vpack.c.b16 %v492, %v490
    %v609 = vpack.c.b16 %v493, %v491
    %v610 = vpack.c.b16 %v496, %v494
    %v611 = vpack.c.b16 %v497, %v495
    %v612 = vpack.c.b16 %v500, %v498
    %v613 = vpack.c.b16 %v501, %v499
    %v614 = vpack.c.b16 %v504, %v502
    %v615 = vpack.c.b16 %v505, %v503
    %v616 = vpack.c.b16 %v508, %v506
    %v617 = vpack.c.b16 %v509, %v507
    %v618 = vpack.c.b16 %v512, %v510
    %v619 = vpack.c.b16 %v513, %v511
    %v620 = vpack.c.b16 %v516, %v514
    %v621 = vpack.c.b16 %v517, %v515
    %v622 = vpack.c.b16 %v520, %v518
    %v623 = vpack.c.b16 %v521, %v519
    %v624 = vpack.c.b16 %v524, %v522
    %v625 = vpack.c.b16 %v525, %v523
    %v626 = vpack.c.b16 %v528, %v526
    %v627 = vpack.c.b16 %v529, %v527
    %vm726 = vcmask 130048
    %v728 = vsel %vm726, %v229, 0
    %730 = vmatprep.subr.bf16.mxu0 %v545
    %731 = vmatpush1.bf16.msra.mxu0 %v544
    %732 = vmatprep.subr.bf16.mxu0 %v543
    %733 = vmatpush1.bf16.msra.mxu0 %v542
    %734 = vmatprep.subr.bf16.mxu0 %v541
    %735 = vmatpush1.bf16.msra.mxu0 %v540
    %736 = vmatprep.subr.bf16.mxu0 %v539
    %737 = vmatpush1.bf16.msra.mxu0 %v538
    %738 = vmatprep.subr.bf16.mxu0 %v537
    %739 = vmatpush1.bf16.msra.mxu0 %v536
    %740 = vmatprep.subr.bf16.mxu0 %v535
    %741 = vmatpush1.bf16.msra.mxu0 %v534
    %742 = vmatprep.subr.bf16.mxu0 %v533
    %743 = vmatpush1.bf16.msra.mxu0 %v532
    %744 = vmatprep.subr.bf16.mxu0 %v531
    %745 = vmatpush1.bf16.msra.mxu0 %v530
    %746 = vmatprep.subr.bf16.mxu0 %v561
    %747 = vmatpush2.bf16.msra.mxu0 %v560
    %748 = vmatprep.subr.bf16.mxu0 %v559
    %749 = vmatpush2.bf16.msra.mxu0 %v558
    %750 = vmatprep.subr.bf16.mxu0 %v557
    %751 = vmatpush2.bf16.msra.mxu0 %v556
    %752 = vmatprep.subr.bf16.mxu0 %v555
    %753 = vmatpush2.bf16.msra.mxu0 %v554
    %754 = vmatprep.subr.bf16.mxu0 %v553
    %755 = vmatpush2.bf16.msra.mxu0 %v552
    %756 = vmatprep.subr.bf16.mxu0 %v551
    %757 = vmatpush2.bf16.msra.mxu0 %v550
    %758 = vmatprep.subr.bf16.mxu0 %v549
    %759 = vmatpush2.bf16.msra.mxu0 %v548
    %760 = vmatprep.subr.bf16.mxu0 %v547
    %761 = vmatpush2.bf16.msra.mxu0 %v546
    %762 = vmatprep.mubr.bf16.mxu0 %v224
    %763 = vmatmul.mubr.bf16.gmra.mxu0 %v223
    %v764 = vpop.f32.mrf.mxu0
    %v765 = vadd.f32 %v194, %v764
    %v766 = vpop.f32.mrf.mxu0
    %v767 = vadd.f32 %v198, %v766
    %v768 = vpop.f32.mrf.mxu0
    %v769 = vadd.f32 %v194, %v768
    %v770 = vpop.f32.mrf.mxu0
    %v771 = vadd.f32 %v198, %v770
    %772 = vdwg.mxu0
    %773 = vmatprep.subr.bf16.mxu0 %v577
    %774 = vmatpush1.bf16.msra.mxu0 %v576
    %775 = vmatprep.subr.bf16.mxu0 %v575
    %776 = vmatpush1.bf16.msra.mxu0 %v574
    %777 = vmatprep.subr.bf16.mxu0 %v573
    %778 = vmatpush1.bf16.msra.mxu0 %v572
    %779 = vmatprep.subr.bf16.mxu0 %v571
    %780 = vmatpush1.bf16.msra.mxu0 %v570
    %781 = vmatprep.subr.bf16.mxu0 %v569
    %782 = vmatpush1.bf16.msra.mxu0 %v568
    %783 = vmatprep.subr.bf16.mxu0 %v567
    %784 = vmatpush1.bf16.msra.mxu0 %v566
    %785 = vmatprep.subr.bf16.mxu0 %v565
    %786 = vmatpush1.bf16.msra.mxu0 %v564
    %787 = vmatprep.subr.bf16.mxu0 %v563
    %788 = vmatpush1.bf16.msra.mxu0 %v562
    %789 = vmatprep.subr.bf16.mxu0 %v593
    %790 = vmatpush2.bf16.msra.mxu0 %v592
    %791 = vmatprep.subr.bf16.mxu0 %v591
    %792 = vmatpush2.bf16.msra.mxu0 %v590
    %793 = vmatprep.subr.bf16.mxu0 %v589
    %794 = vmatpush2.bf16.msra.mxu0 %v588
    %795 = vmatprep.subr.bf16.mxu0 %v587
    %796 = vmatpush2.bf16.msra.mxu0 %v586
    %797 = vmatprep.subr.bf16.mxu0 %v585
    %798 = vmatpush2.bf16.msra.mxu0 %v584
    %799 = vmatprep.subr.bf16.mxu0 %v583
    %800 = vmatpush2.bf16.msra.mxu0 %v582
    %801 = vmatprep.subr.bf16.mxu0 %v581
    %802 = vmatpush2.bf16.msra.mxu0 %v580
    %803 = vmatprep.subr.bf16.mxu0 %v579
    %804 = vmatpush2.bf16.msra.mxu0 %v578
    %805 = vmatprep.mubr.bf16.mxu0 %v226
    %806 = vmatmul.mubr.bf16.gmra.mxu0 %v225
    %v807 = vpop.f32.mrf.mxu0
    %v808 = vadd.f32 %v765, %v807
    %v809 = vpop.f32.mrf.mxu0
    %v810 = vadd.f32 %v767, %v809
    %v811 = vpop.f32.mrf.mxu0
    %v812 = vadd.f32 %v769, %v811
    %v813 = vpop.f32.mrf.mxu0
    %v814 = vadd.f32 %v771, %v813
    %815 = vdwg.mxu0
    %816 = vmatprep.subr.bf16.mxu0 %v609
    %817 = vmatpush1.bf16.msra.mxu0 %v608
    %818 = vmatprep.subr.bf16.mxu0 %v607
    %819 = vmatpush1.bf16.msra.mxu0 %v606
    %820 = vmatprep.subr.bf16.mxu0 %v605
    %821 = vmatpush1.bf16.msra.mxu0 %v604
    %822 = vmatprep.subr.bf16.mxu0 %v603
    %823 = vmatpush1.bf16.msra.mxu0 %v602
    %824 = vmatprep.subr.bf16.mxu0 %v601
    %825 = vmatpush1.bf16.msra.mxu0 %v600
    %826 = vmatprep.subr.bf16.mxu0 %v599
    %827 = vmatpush1.bf16.msra.mxu0 %v598
    %828 = vmatprep.subr.bf16.mxu0 %v597
    %829 = vmatpush1.bf16.msra.mxu0 %v596
    %830 = vmatprep.subr.bf16.mxu0 %v595
    %831 = vmatpush1.bf16.msra.mxu0 %v594
    %832 = vmatprep.subr.bf16.mxu0 %v625
    %833 = vmatpush2.bf16.msra.mxu0 %v624
    %834 = vmatprep.subr.bf16.mxu0 %v623
    %835 = vmatpush2.bf16.msra.mxu0 %v622
    %836 = vmatprep.subr.bf16.mxu0 %v621
    %837 = vmatpush2.bf16.msra.mxu0 %v620
    %838 = vmatprep.subr.bf16.mxu0 %v619
    %839 = vmatpush2.bf16.msra.mxu0 %v618
    %840 = vmatprep.subr.bf16.mxu0 %v617
    %841 = vmatpush2.bf16.msra.mxu0 %v616
    %842 = vmatprep.subr.bf16.mxu0 %v615
    %843 = vmatpush2.bf16.msra.mxu0 %v614
    %844 = vmatprep.subr.bf16.mxu0 %v613
    %845 = vmatpush2.bf16.msra.mxu0 %v612
    %846 = vmatprep.subr.bf16.mxu0 %v611
    %847 = vmatpush2.bf16.msra.mxu0 %v610
    %848 = vmatprep.mubr.bf16.mxu0 %v228
    %849 = vmatmul.mubr.bf16.gmra.mxu0 %v227
    %v850 = vpop.f32.mrf.mxu0
    %v851 = vadd.f32 %v808, %v850
    %v852 = vpop.f32.mrf.mxu0
    %v853 = vadd.f32 %v810, %v852
    %v854 = vpop.f32.mrf.mxu0
    %v855 = vadd.f32 %v812, %v854
    %v856 = vpop.f32.mrf.mxu0
    %v857 = vadd.f32 %v814, %v856
    %858 = vdwg.mxu0
    %859 = vmatprep.subr.bf16.mxu0 0
    %860 = vmatpush1.bf16.msra.mxu0 0
    %861 = vmatprep.subr.bf16.mxu0 0
    %862 = vmatpush1.bf16.msra.mxu0 0
    %863 = vmatprep.subr.bf16.mxu0 0
    %864 = vmatpush1.bf16.msra.mxu0 0
    %865 = vmatprep.subr.bf16.mxu0 0
    %866 = vmatpush1.bf16.msra.mxu0 0
    %867 = vmatprep.subr.bf16.mxu0 0
    %868 = vmatpush1.bf16.msra.mxu0 0
    %869 = vmatprep.subr.bf16.mxu0 0
    %870 = vmatpush1.bf16.msra.mxu0 0
    %871 = vmatprep.subr.bf16.mxu0 0
    %872 = vmatpush1.bf16.msra.mxu0 0
    %873 = vmatprep.subr.bf16.mxu0 %v627
    %874 = vmatpush1.bf16.msra.mxu0 %v626
    %875 = vmatprep.subr.bf16.mxu0 0
    %876 = vmatpush2.bf16.msra.mxu0 0
    %877 = vmatprep.subr.bf16.mxu0 0
    %878 = vmatpush2.bf16.msra.mxu0 0
    %879 = vmatprep.subr.bf16.mxu0 0
    %880 = vmatpush2.bf16.msra.mxu0 0
    %881 = vmatprep.subr.bf16.mxu0 0
    %882 = vmatpush2.bf16.msra.mxu0 0
    %883 = vmatprep.subr.bf16.mxu0 0
    %884 = vmatpush2.bf16.msra.mxu0 0
    %885 = vmatprep.subr.bf16.mxu0 0
    %886 = vmatpush2.bf16.msra.mxu0 0
    %887 = vmatprep.subr.bf16.mxu0 0
    %888 = vmatpush2.bf16.msra.mxu0 0
    %889 = vmatprep.subr.bf16.mxu0 0
    %890 = vmatpush2.bf16.msra.mxu0 0
    %891 = vmatprep.mubr.bf16.mxu0 0
    %892 = vmatmul.mubr.bf16.gmra.mxu0 %v728
    %v893 = vpop.f32.mrf.mxu0
    %v894 = vadd.f32 %v851, %v893
    %v895 = vpop.f32.mrf.mxu0
    %v896 = vadd.f32 %v853, %v895
    %v897 = vpop.f32.mrf.mxu0
    %v898 = vadd.f32 %v855, %v897
    %v899 = vpop.f32.mrf.mxu0
    %v900 = vadd.f32 %v857, %v899
    %901 = vdwg.mxu0
    %vm902 = vcmp.ge.f32.partialorder %v894, 0.0
    %vm903 = vcmp.ge.f32.partialorder %v896, 0.0
    %vm904 = vcmp.ge.f32.partialorder %v898, 0.0
    %vm905 = vcmp.ge.f32.partialorder %v900, 0.0
    %v906 = vmul.f32 %v894, 0.2
    %v907 = vmul.f32 %v896, 0.2
    %v908 = vmul.f32 %v898, 0.2
    %v909 = vmul.f32 %v900, 0.2
    %v910 = vsel %vm902, %v894, %v906
    %v911 = vsel %vm903, %v896, %v907
    %v912 = vsel %vm904, %v898, %v908
    %v913 = vsel %vm905, %v900, %v909
    %v914 = vpack.c.bf16 %v912, %v910
    %v915 = vpack.c.bf16 %v913, %v911
    %v916 = vld [vmem:[#allocation7] sm:$0xf]
    %v917 = vld [vmem:[#allocation7 + $0x4] sm:$0xf]
    %v918 = vld [vmem:[#allocation7 + $0x8] sm:$0xf]
    %v919 = vld [vmem:[#allocation7 + $0xc] sm:$0xf]
    %v920 = vld [vmem:[#allocation7 + $0x10] sm:$0xf]
    %v921 = vld [vmem:[#allocation7 + $0x14] sm:$0xf]
    %v922 = vld [vmem:[#allocation7 + $0x18] sm:$0xf]
    %v923 = vld [vmem:[#allocation7 + $0x1c] sm:$0xf]
    %v924 = vld [vmem:[#allocation7 + $0x20] sm:$0xf]
    %v925 = vld [vmem:[#allocation7 + $0x24] sm:$0xf]
    %v926 = vld [vmem:[#allocation7 + $0x28] sm:$0xf]
    %v927 = vld [vmem:[#allocation7 + $0x2c] sm:$0xf]
    %v928 = vld [vmem:[#allocation7 + $0x30] sm:$0xf]
    %v929 = vld [vmem:[#allocation7 + $0x34] sm:$0xf]
    %v930 = vld [vmem:[#allocation7 + $0x38] sm:$0xf]
    %v931 = vld [vmem:[#allocation7 + $0x3c] sm:$0xf]
    %v932 = vld [vmem:[#allocation7 + $0x40] sm:$0xf]
    %v933 = vld [vmem:[#allocation7 + $0x44] sm:$0xf]
    %v934 = vld [vmem:[#allocation7 + $0x48] sm:$0xf]
    %v935 = vld [vmem:[#allocation7 + $0x4c] sm:$0xf]
    %v936 = vld [vmem:[#allocation7 + $0x50] sm:$0xf]
    %v937 = vld [vmem:[#allocation7 + $0x54] sm:$0xf]
    %v938 = vld [vmem:[#allocation7 + $0x58] sm:$0xf]
    %v939 = vld [vmem:[#allocation7 + $0x5c] sm:$0xf]
    %v940 = vld [vmem:[#allocation7 + $0x60] sm:$0xf]
    %v941 = vld [vmem:[#allocation7 + $0x64] sm:$0xf]
    %v942 = vld [vmem:[#allocation7 + $0x68] sm:$0xf]
    %v943 = vld [vmem:[#allocation7 + $0x6c] sm:$0xf]
    %v944 = vld [vmem:[#allocation7 + $0x70] sm:$0xf]
    %v945 = vld [vmem:[#allocation7 + $0x74] sm:$0xf]
    %v946 = vld [vmem:[#allocation7 + $0x78] sm:$0xf]
    %v947 = vld [vmem:[#allocation7 + $0x7c] sm:$0xf]
    %v948 = vld [vmem:[%s4] sm:$0x1]
    %v950 = vlaneseq
    %v951 = vshrl.u32 %v950, 7
    %v952 = vsub.s32 0, %v951
    %v953 = vrot.slane %v948, %v952
    %v987 = vunpack.c.l.b16 %v916
    %v988 = vunpack.c.l.b16 %v917
    %v989 = vunpack.c.l.b16 %v918
    %v990 = vunpack.c.l.b16 %v919
    %v991 = vunpack.c.l.b16 %v920
    %v992 = vunpack.c.l.b16 %v921
    %v993 = vunpack.c.l.b16 %v922
    %v994 = vunpack.c.l.b16 %v923
    %v995 = vunpack.c.l.b16 %v924
    %v996 = vunpack.c.l.b16 %v925
    %v997 = vunpack.c.l.b16 %v926
    %v998 = vunpack.c.l.b16 %v927
    %v999 = vunpack.c.l.b16 %v928
    %v1000 = vunpack.c.l.b16 %v929
    %v1001 = vunpack.c.l.b16 %v930
    %v1002 = vunpack.c.l.b16 %v931
    %v1003 = vunpack.c.l.b16 %v932
    %v1004 = vunpack.c.l.b16 %v933
    %v1005 = vunpack.c.l.b16 %v934
    %v1006 = vunpack.c.l.b16 %v935
    %v1007 = vunpack.c.l.b16 %v936
    %v1008 = vunpack.c.l.b16 %v937
    %v1009 = vunpack.c.l.b16 %v938
    %v1010 = vunpack.c.l.b16 %v939
    %v1011 = vunpack.c.l.b16 %v940
    %v1012 = vunpack.c.l.b16 %v941
    %v1013 = vunpack.c.l.b16 %v942
    %v1014 = vunpack.c.l.b16 %v943
    %v1015 = vunpack.c.l.b16 %v944
    %v1016 = vunpack.c.l.b16 %v945
    %v1017 = vunpack.c.l.b16 %v946
    %v1018 = vunpack.c.l.b16 %v947
    %v1019 = vpack.c.b16 %v988, %v987
    %v1020 = vpack.c.b16 %v990, %v989
    %v1021 = vpack.c.b16 %v992, %v991
    %v1022 = vpack.c.b16 %v994, %v993
    %v1023 = vpack.c.b16 %v996, %v995
    %v1024 = vpack.c.b16 %v998, %v997
    %v1025 = vpack.c.b16 %v1000, %v999
    %v1026 = vpack.c.b16 %v1002, %v1001
    %v1027 = vpack.c.b16 %v1004, %v1003
    %v1028 = vpack.c.b16 %v1006, %v1005
    %v1029 = vpack.c.b16 %v1008, %v1007
    %v1030 = vpack.c.b16 %v1010, %v1009
    %v1031 = vpack.c.b16 %v1012, %v1011
    %v1032 = vpack.c.b16 %v1014, %v1013
    %v1033 = vpack.c.b16 %v1016, %v1015
    %v1034 = vpack.c.b16 %v1018, %v1017
    %1051 = vmatprep.subr.bf16.mxu0 0
    %1052 = vmatpush1.bf16.msra.mxu0 %v1026
    %1053 = vmatprep.subr.bf16.mxu0 0
    %1054 = vmatpush1.bf16.msra.mxu0 %v1025
    %1055 = vmatprep.subr.bf16.mxu0 0
    %1056 = vmatpush1.bf16.msra.mxu0 %v1024
    %1057 = vmatprep.subr.bf16.mxu0 0
    %1058 = vmatpush1.bf16.msra.mxu0 %v1023
    %1059 = vmatprep.subr.bf16.mxu0 0
    %1060 = vmatpush1.bf16.msra.mxu0 %v1022
    %1061 = vmatprep.subr.bf16.mxu0 0
    %1062 = vmatpush1.bf16.msra.mxu0 %v1021
    %1063 = vmatprep.subr.bf16.mxu0 0
    %1064 = vmatpush1.bf16.msra.mxu0 %v1020
    %1065 = vmatprep.subr.bf16.mxu0 0
    %1066 = vmatpush1.bf16.msra.mxu0 %v1019
    %1067 = vmatprep.subr.bf16.mxu0 0
    %1068 = vmatpush2.bf16.msra.mxu0 %v1034
    %1069 = vmatprep.subr.bf16.mxu0 0
    %1070 = vmatpush2.bf16.msra.mxu0 %v1033
    %1071 = vmatprep.subr.bf16.mxu0 0
    %1072 = vmatpush2.bf16.msra.mxu0 %v1032
    %1073 = vmatprep.subr.bf16.mxu0 0
    %1074 = vmatpush2.bf16.msra.mxu0 %v1031
    %1075 = vmatprep.subr.bf16.mxu0 0
    %1076 = vmatpush2.bf16.msra.mxu0 %v1030
    %1077 = vmatprep.subr.bf16.mxu0 0
    %1078 = vmatpush2.bf16.msra.mxu0 %v1029
    %1079 = vmatprep.subr.bf16.mxu0 0
    %1080 = vmatpush2.bf16.msra.mxu0 %v1028
    %1081 = vmatprep.subr.bf16.mxu0 0
    %1082 = vmatpush2.bf16.msra.mxu0 %v1027
    %1083 = vmatprep.mubr.bf16.mxu0 %v915
    %1084 = vmatmul.mubr.bf16.gmra.mxu0 %v914
    %v1085 = vpop.f32.mrf.mxu0
    %v1086 = vadd.f32 %v953, %v1085
    %v1087 = vpop.f32.mrf.mxu0
    %v1088 = vpop.f32.mrf.mxu0
    %v1089 = vadd.f32 %v953, %v1088
    %v1090 = vpop.f32.mrf.mxu0
    %1091 = vdwg.mxu0
    %vm1092 = vcmp.ge.f32.partialorder %v1086, 0.0
    %vm1093 = vcmp.ge.f32.partialorder %v1089, 0.0
    %v1094 = vmul.f32 %v1086, 0.2
    %v1095 = vmul.f32 %v1089, 0.2
    %v1096 = vsel %vm1092, %v1086, %v1094
    %v1097 = vsel %vm1093, %v1089, %v1095
    %v1098 = vpack.c.bf16 %v1097, %v1096
    %v1099 = vld [vmem:[#allocation8] sm:$0xf]
    %v1100 = vld [vmem:[#allocation8 + $0x4] sm:$0xf]
    %v1101 = vld [vmem:[#allocation8 + $0x8] sm:$0xf]
    %v1102 = vld [vmem:[#allocation8 + $0xc] sm:$0xf]
    %v1103 = vld [vmem:[#allocation8 + $0x10] sm:$0xf]
    %v1104 = vld [vmem:[#allocation8 + $0x14] sm:$0xf]
    %v1105 = vld [vmem:[#allocation8 + $0x18] sm:$0xf]
    %v1106 = vld [vmem:[#allocation8 + $0x1c] sm:$0xf]
    %v1107 = vld [vmem:[#allocation8 + $0x20] sm:$0xf]
    %v1108 = vld [vmem:[#allocation8 + $0x24] sm:$0xf]
    %v1109 = vld [vmem:[#allocation8 + $0x28] sm:$0xf]
    %v1110 = vld [vmem:[#allocation8 + $0x2c] sm:$0xf]
    %v1111 = vld [vmem:[#allocation8 + $0x30] sm:$0xf]
    %v1112 = vld [vmem:[#allocation8 + $0x34] sm:$0xf]
    %v1113 = vld [vmem:[#allocation8 + $0x38] sm:$0xf]
    %v1114 = vld [vmem:[#allocation8 + $0x3c] sm:$0xf]
    %v1115 = vld [vmem:[%s6] sm:$0x1]
    %v1117 = vlaneseq
    %v1118 = vshrl.u32 %v1117, 7
    %v1119 = vsub.s32 0, %v1118
    %v1120 = vrot.slane %v1115, %v1119
    %v1138 = vunpack.c.l.b16 %v1099
    %v1139 = vunpack.c.l.b16 %v1100
    %v1140 = vunpack.c.l.b16 %v1101
    %v1141 = vunpack.c.l.b16 %v1102
    %v1142 = vunpack.c.l.b16 %v1103
    %v1143 = vunpack.c.l.b16 %v1104
    %v1144 = vunpack.c.l.b16 %v1105
    %v1145 = vunpack.c.l.b16 %v1106
    %v1146 = vunpack.c.l.b16 %v1107
    %v1147 = vunpack.c.l.b16 %v1108
    %v1148 = vunpack.c.l.b16 %v1109
    %v1149 = vunpack.c.l.b16 %v1110
    %v1150 = vunpack.c.l.b16 %v1111
    %v1151 = vunpack.c.l.b16 %v1112
    %v1152 = vunpack.c.l.b16 %v1113
    %v1153 = vunpack.c.l.b16 %v1114
    %v1154 = vpack.c.b16 %v1139, %v1138
    %v1155 = vpack.c.b16 %v1141, %v1140
    %v1156 = vpack.c.b16 %v1143, %v1142
    %v1157 = vpack.c.b16 %v1145, %v1144
    %v1158 = vpack.c.b16 %v1147, %v1146
    %v1159 = vpack.c.b16 %v1149, %v1148
    %v1160 = vpack.c.b16 %v1151, %v1150
    %v1161 = vpack.c.b16 %v1153, %v1152
    %1170 = vmatprep.subr.bf16.mxu0 0
    %1171 = vmatpush1.bf16.msra.mxu0 %v1161
    %1172 = vmatprep.subr.bf16.mxu0 0
    %1173 = vmatpush1.bf16.msra.mxu0 %v1160
    %1174 = vmatprep.subr.bf16.mxu0 0
    %1175 = vmatpush1.bf16.msra.mxu0 %v1159
    %1176 = vmatprep.subr.bf16.mxu0 0
    %1177 = vmatpush1.bf16.msra.mxu0 %v1158
    %1178 = vmatprep.subr.bf16.mxu0 0
    %1179 = vmatpush1.bf16.msra.mxu0 %v1157
    %1180 = vmatprep.subr.bf16.mxu0 0
    %1181 = vmatpush1.bf16.msra.mxu0 %v1156
    %1182 = vmatprep.subr.bf16.mxu0 0
    %1183 = vmatpush1.bf16.msra.mxu0 %v1155
    %1184 = vmatprep.subr.bf16.mxu0 0
    %1185 = vmatpush1.bf16.msra.mxu0 %v1154
    %1186 = vmatprep.subr.bf16.mxu0 0
    %1187 = vmatpush2.bf16.msra.mxu0 0
    %1188 = vmatprep.subr.bf16.mxu0 0
    %1189 = vmatpush2.bf16.msra.mxu0 0
    %1190 = vmatprep.subr.bf16.mxu0 0
    %1191 = vmatpush2.bf16.msra.mxu0 0
    %1192 = vmatprep.subr.bf16.mxu0 0
    %1193 = vmatpush2.bf16.msra.mxu0 0
    %1194 = vmatprep.subr.bf16.mxu0 0
    %1195 = vmatpush2.bf16.msra.mxu0 0
    %1196 = vmatprep.subr.bf16.mxu0 0
    %1197 = vmatpush2.bf16.msra.mxu0 0
    %1198 = vmatprep.subr.bf16.mxu0 0
    %1199 = vmatpush2.bf16.msra.mxu0 0
    %1200 = vmatprep.subr.bf16.mxu0 0
    %1201 = vmatpush2.bf16.msra.mxu0 0
    %1202 = vmatprep.mubr.bf16.mxu0 0
    %1203 = vmatmul.mubr.bf16.gmra.mxu0 %v1098
    %v1204 = vpop.f32.mrf.mxu0
    %v1205 = vadd.f32 %v1120, %v1204
    %v1206 = vpop.f32.mrf.mxu0
    %v1207 = vpop.f32.mrf.mxu0
    %v1208 = vadd.f32 %v1120, %v1207
    %v1209 = vpop.f32.mrf.mxu0
    %1210 = vdwg.mxu0
    %v1211 = vsub.f32 0.0, %v1205
    %v1212 = vsub.f32 0.0, %v1208
    %v1213 = vmul.f32 %v1211, 1.442695
    %v1214 = vpow.pop %v1213
    %v1215 = vmul.f32 %v1212, 1.442695
    %v1216 = vpow.pop %v1215
    %v1217 = vadd.f32 %v1214, 1.0
    %v1218 = vadd.f32 %v1216, 1.0
    %v1219 = vrcp.pop %v1217
    %v1220 = vmul.f32 1.0, %v1219
    %v1221 = vrcp.pop %v1218
    %v1222 = vmul.f32 1.0, %v1221
    %v1223 = vpack.c.bf16 %v1222, %v1220
    %v1225 = vunpack.c.l.b16 %v1223
    %v1226 = vunpack.c.h.b16 %v1223
    %v1227 = vpack.c.b16 %v1225, %v1225
    %v1228 = vpack.c.b16 %v1226, %v1226
    %1231 = vst [vmem:[#allocation10] sm:$0xf] %v1227
    %1232 = vst [vmem:[#allocation10 + $0x4] sm:$0xf] %v1228
    // Predicated region
    $region46: #{tpu_custom_call.1} parent=1 // pred_check
      _
    $region47: #{tpu_custom_call.1} parent=1 // pred_check_branch
      %1234 = sbr.rel (0) target = $region49
    $region48: #{tpu_custom_call.1} parent=1 // pred_region
      %s1236 = ssub.s32 128, 128
      %1237 = vsyncadd [#allocation4], %s1236
      %s1238 = sshll.u32 [#allocation10], 4
      %s1239 = int_to_ptr.vmem [resolvable:$true] %s1238
      %1244 = dma.vmem_to_hbm [thread:$0]  %s1239, 128, %s7, [#allocation4], 64, 64, 4
    $region49: #{tpu_custom_call.1} parent=1 // pred_fallthru
      _
    // Predicated region
    $region50: #{tpu_custom_call.1} parent=1 // pred_check
      _
    $region51: #{tpu_custom_call.1} parent=1 // pred_check_branch
      %1246 = sbr.rel (0) target = $region53
    $region52: #{tpu_custom_call.1} parent=1 // pred_region
      %1247 = dma.done [#allocation4], 128
    $region53: #{tpu_custom_call.1} parent=1 // pred_fallthru
      _
    %1248 = vsyncpa [#allocation3], 1
    %1249 = vsyncpa [#allocation6], 1
    %1250 = vsyncpa [#allocation9], 1
    %1251 = vsyncpa [#allocation4], 1

</llo_original>
